<compile_context>
chip_gen: v6e
topology: v6e:2x2x1
jax: 0.10.0
libtpu: 0.0.40
codegen_flags: <defaults>
</compile_context>

<pallas_src>
import jax
import jax.numpy as jnp
from jax.experimental import pallas as pl
from jax.experimental.pallas import tpu as pltpu


# ---------------------------------------------------------------------------
# Fused kernel for one residual block:
#   out = conv2(lrelu(conv1(lrelu(x)) )) + x      (both convs 'same', biased)
# ---------------------------------------------------------------------------
def _make_fused_block_kernel(K, d1, d2, tT, H, Hb, T_total):
    pad1 = (K - 1) * d1 // 2
    pad2 = (K - 1) * d2 // 2
    assert H == pad1 + pad2
    Tw = tT + 2 * H            # rows of activated-x window kept in VMEM scratch
    Th = tT + 2 * pad2         # rows of h needed by the second conv

    def lrelu(v):
        return jnp.where(v > 0, v, jnp.float32(0.1) * v)

    def kernel(x_ref, xl_ref, xr_ref, w1_ref, b1_ref, w2_ref, b2_ref,
               o_ref, xa_scr, ha_scr):
        i = pl.program_id(1)
        n_t = pl.num_programs(1)

        x_main = x_ref[0]                       # (tT, C) f32 (also the residual)
        left = xl_ref[0][Hb - H:, :]            # last H rows of previous tile
        right = xr_ref[0][:H, :]                # first H rows of next tile
        # Halo rows that fall outside [0, T) are the conv's zero padding.
        left = jnp.where(i == 0, jnp.zeros_like(left), left)
        right = jnp.where(i == n_t - 1, jnp.zeros_like(right), right)

        # LeakyReLU in f32 on the VPU; assemble the haloed window in scratch.
        xa_scr[0:H, :] = lrelu(left)
        xa_scr[H:H + tT, :] = lrelu(x_main)
        xa_scr[H + tT:Tw, :] = lrelu(right)

        # ---- conv1 (dilation d1): fold K taps into ONE bf16 MXU matmul ----
        stack1 = jnp.concatenate(
            [xa_scr[k * d1:k * d1 + Th, :].astype(jnp.bfloat16)
             for k in range(K)], axis=-1)                       # (Th, K*C)
        h = jnp.dot(stack1, w1_ref[...],
                    preferred_element_type=jnp.float32)
        h = h + b1_ref[...]                                     # (Th, C) f32
        # h rows whose global index is outside [0, T) are conv2's zero padding.
        r = jax.lax.broadcasted_iota(jnp.int32, (Th, 1), 0)
        g = i * tT - pad2 + r
        h = jnp.where((g >= 0) & (g < T_total), h, 0.0)
        ha_scr[...] = lrelu(h)

        # ---- conv2 (dilation d2) + bias + fused residual add ----
        stack2 = jnp.concatenate(
            [ha_scr[k * d2:k * d2 + tT, :].astype(jnp.bfloat16)
             for k in range(K)], axis=-1)                       # (tT, K*C)
        y = jnp.dot(stack2, w2_ref[...],
                    preferred_element_type=jnp.float32)
        y = y + b2_ref[...] + x_main
        o_ref[0] = y.astype(o_ref.dtype)

    return kernel


def fused_resblock_block(x_btc, w1, b1, w2, b2, d1, d2, *, kernel_size,
                         tT=128):
    """One residual block, fully fused in a single pallas_call.

    x_btc : (B, T, C) f32, channels-last
    w1,w2 : (K, C_in, C_out) f32 (weight-norm already folded)
    b1,b2 : (C,) f32
    """
    B, T, C = x_btc.shape
    K = kernel_size
    assert K % 2 == 1
    pad1 = (K - 1) * d1 // 2
    pad2 = (K - 1) * d2 // 2
    H = pad1 + pad2
    assert H >= 1

    tT = min(tT, T)
    Hb = ((H + 7) // 8) * 8          # halo fetched at 8-row (sublane) granularity
    assert T % tT == 0, "T must be a multiple of the time tile"
    assert tT % 8 == 0 and tT % Hb == 0 and Hb <= tT
    nT = T // tT
    R = tT // Hb
    max_hb = T // Hb - 1

    # Fold the K taps into a (K*C, C) bf16 matrix (rows [k*C:(k+1)*C] = tap k).
    w1f = jnp.reshape(w1, (K * C, C)).astype(jnp.bfloat16)
    w2f = jnp.reshape(w2, (K * C, C)).astype(jnp.bfloat16)
    b1r = b1.reshape(1, C).astype(jnp.float32)
    b2r = b2.reshape(1, C).astype(jnp.float32)

    kernel = _make_fused_block_kernel(K, d1, d2, tT, H, Hb, T)

    def main_map(b, i):
        return (b, i, 0)

    def left_map(b, i):          # block holding rows [i*tT - Hb, i*tT)
        return (b, jnp.maximum(i * R - 1, 0), 0)

    def right_map(b, i):         # block holding rows [(i+1)*tT, (i+1)*tT + Hb)
        return (b, jnp.minimum((i + 1) * R, max_hb), 0)

    # TODO(synk): for small channel counts (C < 128) a time-on-lanes layout
    # would avoid masked vst stores; real HiFi-GAN C here is lane-dense.
    return pl.pallas_call(
        kernel,
        out_shape=jax.ShapeDtypeStruct((B, T, C), x_btc.dtype),
        grid=(B, nT),
        in_specs=[
            pl.BlockSpec((1, tT, C), main_map),
            pl.BlockSpec((1, Hb, C), left_map),
            pl.BlockSpec((1, Hb, C), right_map),
            pl.BlockSpec((K * C, C), lambda b, i: (0, 0)),
            pl.BlockSpec((1, C), lambda b, i: (0, 0)),
            pl.BlockSpec((K * C, C), lambda b, i: (0, 0)),
            pl.BlockSpec((1, C), lambda b, i: (0, 0)),
        ],
        out_specs=pl.BlockSpec((1, tT, C), main_map),
        scratch_shapes=[
            pltpu.VMEM((tT + 2 * H, C), jnp.float32),      # activated x window
            pltpu.VMEM((tT + 2 * pad2, C), jnp.float32),   # activated h window
        ],
        compiler_params=pltpu.CompilerParams(
            dimension_semantics=("parallel", "parallel")),
    )(x_btc, x_btc, x_btc, w1f, b1r, w2f, b2r)


# ---------------------------------------------------------------------------
# Parameter construction (deterministic, weight-norm folded host-side)
# ---------------------------------------------------------------------------
def _weight_norm_conv_params(key, n_channels, kernel_size):
    """Returns (w_kio, bias) with w_kio of shape (K, C_in, C_out), f32."""
    kv, kg, kb = jax.random.split(key, 3)
    v = jax.random.normal(kv, (n_channels, n_channels, kernel_size),
                          jnp.float32) * 0.1
    g = jax.random.uniform(kg, (n_channels, 1, 1), jnp.float32, 0.5, 1.5)
    bias = jax.random.normal(kb, (n_channels,), jnp.float32) * 0.1
    norm = jnp.sqrt(jnp.sum(v * v, axis=(1, 2), keepdims=True))
    w_oik = g * v / norm                              # (C_out, C_in, K)
    w_kio = jnp.transpose(w_oik, (2, 1, 0))           # (K, C_in, C_out)
    return w_kio, bias


def make_resblock_params(key, n_channels, kernel_size, dilation):
    params = []
    for _ in dilation:
        block = []
        for _ in range(2):
            key, sub = jax.random.split(key)
            block.append(_weight_norm_conv_params(sub, n_channels,
                                                  kernel_size))
        params.append(block)
    return params


# ---------------------------------------------------------------------------
# ResBlock forward (PyTorch semantics: input/output are (B, C, T))
# ---------------------------------------------------------------------------
def resblock_forward(x_bct, params, dilation, kernel_size, tT=128):
    # TODO(synk): the surrounding generator should run NWC end-to-end so these
    # two full-tensor transposes (HBM passes) disappear entirely.
    y = jnp.transpose(x_bct, (0, 2, 1))               # (B, T, C)
    for (conv1, conv2), (d1, d2) in zip(params, dilation):
        (w1, b1), (w2, b2) = conv1, conv2
        y = fused_resblock_block(y, w1, b1, w2, b2, d1, d2,
                                 kernel_size=kernel_size, tT=tT)
    return jnp.transpose(y, (0, 2, 1))                # back to (B, C, T)


# ---------------------------------------------------------------------------
# Pure-JAX reference (same bf16-in / f32-accumulate numerics as the kernel)
# ---------------------------------------------------------------------------
def _ref_lrelu_conv(x_btc, w_kio, b, d):
    xa = jnp.where(x_btc > 0, x_btc, 0.1 * x_btc)
    pad = (w_kio.shape[0] - 1) * d // 2
    out = jax.lax.conv_general_dilated(
        xa.astype(jnp.bfloat16), w_kio.astype(jnp.bfloat16),
        window_strides=(1,), padding=[(pad, pad)], rhs_dilation=(d,),
        dimension_numbers=("NWC", "WIO", "NWC"),
        preferred_element_type=jnp.float32)
    return out + b[None, None, :]


def resblock_ref(x_bct, params, dilation):
    y = jnp.transpose(x_bct, (0, 2, 1))
    for (conv1, conv2), (d1, d2) in zip(params, dilation):
        (w1, b1), (w2, b2) = conv1, conv2
        h = _ref_lrelu_conv(y, w1, b1, d1)
        y = _ref_lrelu_conv(h, w2, b2, d2) + y
    return jnp.transpose(y, (0, 2, 1))


# ---------------------------------------------------------------------------
if __name__ == "__main__":
    B, C, T = 2, 128, 512
    kernel_size = 3
    dilation = ((1, 1), (3, 1), (5, 1))      # HiFi-GAN style

    key = jax.random.PRNGKey(0)
    kx, kp = jax.random.split(key)
    x = jax.random.normal(kx, (B, C, T), jnp.float32)   # PyTorch NCL layout
    params = make_resblock_params(kp, C, kernel_size, dilation)

    out = jax.block_until_ready(
        resblock_forward(x, params, dilation, kernel_size, tT=128))
    ref = jax.block_until_ready(resblock_ref(x, params, dilation))

    assert out.shape == (B, C, T)
    err = float(jnp.max(jnp.abs(out - ref)))
    assert err < 1e-2, err
    print("KERNEL_OK")
</pallas_src>

<mosaic_0001>
module attributes {stable_mosaic.version = 11 : i64} {
  func.func @kernel(%arg0: i32, %arg1: i32, %arg2: memref<1x128x128xf32, #tpu.memory_space<vmem>>, %arg3: memref<1x8x128xf32, #tpu.memory_space<vmem>>, %arg4: memref<1x8x128xf32, #tpu.memory_space<vmem>>, %arg5: memref<384x128xbf16, #tpu.memory_space<vmem>>, %arg6: memref<1x128xf32, #tpu.memory_space<vmem>>, %arg7: memref<384x128xbf16, #tpu.memory_space<vmem>>, %arg8: memref<1x128xf32, #tpu.memory_space<vmem>>, %arg9: memref<1x128x128xf32, #tpu.memory_space<vmem>>, %arg10: memref<132x128xf32, #tpu.memory_space<vmem>>, %arg11: memref<130x128xf32, #tpu.memory_space<vmem>>) attributes {dimension_semantics = [#tpu.dimension_semantics<parallel>, #tpu.dimension_semantics<parallel>], iteration_bounds = array<i64: 2, 4>, scalar_prefetch = 0 : i64, scratch_operands = 2 : i64, tpu.core_type = #tpu.core_type<tc>, window_params = [{transform_indices = @transform_0, window_bounds = array<i64: 1, 128, 128>}, {transform_indices = @transform_1, window_bounds = array<i64: 1, 8, 128>}, {transform_indices = @transform_2, window_bounds = array<i64: 1, 8, 128>}, {pipeline_mode = #tpu.pipeline_mode<synchronous>, transform_indices = @transform_3, window_bounds = array<i64: 384, 128>}, {pipeline_mode = #tpu.pipeline_mode<synchronous>, transform_indices = @transform_4, window_bounds = array<i64: 1, 128>}, {pipeline_mode = #tpu.pipeline_mode<synchronous>, transform_indices = @transform_5, window_bounds = array<i64: 384, 128>}, {pipeline_mode = #tpu.pipeline_mode<synchronous>, transform_indices = @transform_6, window_bounds = array<i64: 1, 128>}, {transform_indices = @transform_7, window_bounds = array<i64: 1, 128, 128>}]} {
    %c0 = arith.constant 0 : index
    %c0_0 = arith.constant 0 : index
    %c0_1 = arith.constant 0 : index
    %0 = vector.load %arg2[%c0, %c0_0, %c0_1] : memref<1x128x128xf32, #tpu.memory_space<vmem>>, vector<1x128x128xf32>
    %1 = vector.shape_cast %0 : vector<1x128x128xf32> to vector<128x128xf32>
    %c0_2 = arith.constant 0 : index
    %c0_3 = arith.constant 0 : index
    %c0_4 = arith.constant 0 : index
    %2 = vector.load %arg3[%c0_2, %c0_3, %c0_4] : memref<1x8x128xf32, #tpu.memory_space<vmem>>, vector<1x8x128xf32>
    %3 = vector.shape_cast %2 : vector<1x8x128xf32> to vector<8x128xf32>
    %4 = vector.extract_strided_slice %3 {offsets = [6, 0], sizes = [2, 128], strides = [1, 1]} : vector<8x128xf32> to vector<2x128xf32>
    %c0_5 = arith.constant 0 : index
    %c0_6 = arith.constant 0 : index
    %c0_7 = arith.constant 0 : index
    %5 = vector.load %arg4[%c0_5, %c0_6, %c0_7] : memref<1x8x128xf32, #tpu.memory_space<vmem>>, vector<1x8x128xf32>
    %6 = vector.shape_cast %5 : vector<1x8x128xf32> to vector<8x128xf32>
    %7 = vector.extract_strided_slice %6 {offsets = [0, 0], sizes = [2, 128], strides = [1, 1]} : vector<8x128xf32> to vector<2x128xf32>
    %c0_i32 = arith.constant 0 : i32
    %8 = arith.cmpi eq, %arg1, %c0_i32 : i32
    %cst = arith.constant 0.000000e+00 : f32
    %9 = vector.broadcast %cst : f32 to vector<2x128xf32>
    %10 = arith.select %8, %9, %4 : vector<2x128xf32>
    %c3_i32 = arith.constant 3 : i32
    %11 = arith.cmpi eq, %arg1, %c3_i32 : i32
    %cst_8 = arith.constant 0.000000e+00 : f32
    %12 = vector.broadcast %cst_8 : f32 to vector<2x128xf32>
    %13 = arith.select %11, %12, %7 : vector<2x128xf32>
    %cst_9 = arith.constant 0.000000e+00 : f32
    %14 = vector.broadcast %cst_9 : f32 to vector<2x128xf32>
    %15 = arith.cmpf ogt, %10, %14 : vector<2x128xf32>
    %cst_10 = arith.constant 1.000000e-01 : f32
    %16 = vector.broadcast %cst_10 : f32 to vector<2x128xf32>
    %17 = arith.mulf %16, %10 : vector<2x128xf32>
    %18 = arith.select %15, %10, %17 : vector<2x128xi1>, vector<2x128xf32>
    %c0_11 = arith.constant 0 : index
    %c0_12 = arith.constant 0 : index
    %19 = vector.load %arg10[%c0_11, %c0_12] : memref<132x128xf32, #tpu.memory_space<vmem>>, vector<2x128xf32>
    tpu.vector_store %arg10[%c0_11, %c0_12], %18 {strides = array<i32>} : memref<132x128xf32, #tpu.memory_space<vmem>>, vector<2x128xf32>,
    %cst_13 = arith.constant 0.000000e+00 : f32
    %20 = vector.broadcast %cst_13 : f32 to vector<128x128xf32>
    %21 = arith.cmpf ogt, %1, %20 : vector<128x128xf32>
    %cst_14 = arith.constant 1.000000e-01 : f32
    %22 = vector.broadcast %cst_14 : f32 to vector<128x128xf32>
    %23 = arith.mulf %22, %1 : vector<128x128xf32>
    %24 = arith.select %21, %1, %23 : vector<128x128xi1>, vector<128x128xf32>
    %c2 = arith.constant 2 : index
    %c0_15 = arith.constant 0 : index
    %25 = vector.load %arg10[%c2, %c0_15] : memref<132x128xf32, #tpu.memory_space<vmem>>, vector<128x128xf32>
    tpu.vector_store %arg10[%c2, %c0_15], %24 {strides = array<i32>} : memref<132x128xf32, #tpu.memory_space<vmem>>, vector<128x128xf32>,
    %cst_16 = arith.constant 0.000000e+00 : f32
    %26 = vector.broadcast %cst_16 : f32 to vector<2x128xf32>
    %27 = arith.cmpf ogt, %13, %26 : vector<2x128xf32>
    %cst_17 = arith.constant 1.000000e-01 : f32
    %28 = vector.broadcast %cst_17 : f32 to vector<2x128xf32>
    %29 = arith.mulf %28, %13 : vector<2x128xf32>
    %30 = arith.select %27, %13, %29 : vector<2x128xi1>, vector<2x128xf32>
    %c130 = arith.constant 130 : index
    %c0_18 = arith.constant 0 : index
    %31 = vector.load %arg10[%c130, %c0_18] : memref<132x128xf32, #tpu.memory_space<vmem>>, vector<2x128xf32>
    tpu.vector_store %arg10[%c130, %c0_18], %30 {strides = array<i32>} : memref<132x128xf32, #tpu.memory_space<vmem>>, vector<2x128xf32>,
    %c0_19 = arith.constant 0 : index
    %c0_20 = arith.constant 0 : index
    %32 = vector.load %arg10[%c0_19, %c0_20] : memref<132x128xf32, #tpu.memory_space<vmem>>, vector<130x128xf32>
    %33 = arith.truncf %32 : vector<130x128xf32> to vector<130x128xbf16>
    %c1 = arith.constant 1 : index
    %c0_21 = arith.constant 0 : index
    %34 = vector.load %arg10[%c1, %c0_21] : memref<132x128xf32, #tpu.memory_space<vmem>>, vector<130x128xf32>
    %35 = arith.truncf %34 : vector<130x128xf32> to vector<130x128xbf16>
    %c2_22 = arith.constant 2 : index
    %c0_23 = arith.constant 0 : index
    %36 = vector.load %arg10[%c2_22, %c0_23] : memref<132x128xf32, #tpu.memory_space<vmem>>, vector<130x128xf32>
    %37 = arith.truncf %36 : vector<130x128xf32> to vector<130x128xbf16>
    %38 = tpu.concatenate %33, %35, %37 in 1 : vector<130x128xbf16>, vector<130x128xbf16>, vector<130x128xbf16> -> vector<130x384xbf16>
    %c0_24 = arith.constant 0 : index
    %c0_25 = arith.constant 0 : index
    %39 = vector.load %arg5[%c0_24, %c0_25] : memref<384x128xbf16, #tpu.memory_space<vmem>>, vector<384x128xbf16>
    %cst_26 = arith.constant dense<0.000000e+00> : vector<130x128xf32>
    %40 = tpu.matmul %38, %39, %cst_26 {dimension_numbers = #tpu.dot_dimension_numbers<[1], [0], [0], [1], [0, 0, 1, 1], [], []>} : vector<130x384xbf16>, vector<384x128xbf16>, vector<130x128xf32> -> vector<130x128xf32>
    %c0_27 = arith.constant 0 : index
    %c0_28 = arith.constant 0 : index
    %41 = vector.load %arg6[%c0_27, %c0_28] : memref<1x128xf32, #tpu.memory_space<vmem>>, vector<1x128xf32>
    %42 = vector.broadcast %41 : vector<1x128xf32> to vector<130x128xf32>
    %43 = arith.addf %40, %42 : vector<130x128xf32>
    %44 = tpu.iota {dimensions = array<i32: 0>} : vector<130x1xi32>
    %c128_i32 = arith.constant 128 : i32
    %45 = arith.muli %arg1, %c128_i32 : i32
    %c1_i32 = arith.constant 1 : i32
    %46 = arith.subi %45, %c1_i32 : i32
    %47 = vector.broadcast %46 : i32 to vector<130x1xi32>
    %48 = arith.addi %47, %44 : vector<130x1xi32>
    %c0_i32_29 = arith.constant 0 : i32
    %49 = vector.broadcast %c0_i32_29 : i32 to vector<130x1xi32>
    %50 = arith.cmpi sge, %48, %49 : vector<130x1xi32>
    %c512_i32 = arith.constant 512 : i32
    %51 = vector.broadcast %c512_i32 : i32 to vector<130x1xi32>
    %52 = arith.cmpi slt, %48, %51 : vector<130x1xi32>
    %53 = arith.andi %50, %52 : vector<130x1xi1>
    %cst_30 = arith.constant 0.000000e+00 : f32
    %54 = vector.shape_cast %53 : vector<130x1xi1> to vector<130x1xi1>
    %55 = vector.broadcast %54 : vector<130x1xi1> to vector<130x128xi1>
    %56 = vector.broadcast %cst_30 : f32 to vector<130x128xf32>
    %57 = arith.select %55, %43, %56 : vector<130x128xi1>, vector<130x128xf32>
    %cst_31 = arith.constant 0.000000e+00 : f32
    %58 = vector.broadcast %cst_31 : f32 to vector<130x128xf32>
    %59 = arith.cmpf ogt, %57, %58 : vector<130x128xf32>
    %cst_32 = arith.constant 1.000000e-01 : f32
    %60 = vector.broadcast %cst_32 : f32 to vector<130x128xf32>
    %61 = arith.mulf %60, %57 : vector<130x128xf32>
    %62 = arith.select %59, %57, %61 : vector<130x128xi1>, vector<130x128xf32>
    %c0_33 = arith.constant 0 : index
    %c0_34 = arith.constant 0 : index
    %63 = vector.load %arg11[%c0_33, %c0_34] : memref<130x128xf32, #tpu.memory_space<vmem>>, vector<130x128xf32>
    tpu.vector_store %arg11[%c0_33, %c0_34], %62 {strides = array<i32>} : memref<130x128xf32, #tpu.memory_space<vmem>>, vector<130x128xf32>,
    %c0_35 = arith.constant 0 : index
    %c0_36 = arith.constant 0 : index
    %64 = vector.load %arg11[%c0_35, %c0_36] : memref<130x128xf32, #tpu.memory_space<vmem>>, vector<128x128xf32>
    %65 = arith.truncf %64 : vector<128x128xf32> to vector<128x128xbf16>
    %c1_37 = arith.constant 1 : index
    %c0_38 = arith.constant 0 : index
    %66 = vector.load %arg11[%c1_37, %c0_38] : memref<130x128xf32, #tpu.memory_space<vmem>>, vector<128x128xf32>
    %67 = arith.truncf %66 : vector<128x128xf32> to vector<128x128xbf16>
    %c2_39 = arith.constant 2 : index
    %c0_40 = arith.constant 0 : index
    %68 = vector.load %arg11[%c2_39, %c0_40] : memref<130x128xf32, #tpu.memory_space<vmem>>, vector<128x128xf32>
    %69 = arith.truncf %68 : vector<128x128xf32> to vector<128x128xbf16>
    %70 = tpu.concatenate %65, %67, %69 in 1 : vector<128x128xbf16>, vector<128x128xbf16>, vector<128x128xbf16> -> vector<128x384xbf16>
    %c0_41 = arith.constant 0 : index
    %c0_42 = arith.constant 0 : index
    %71 = vector.load %arg7[%c0_41, %c0_42] : memref<384x128xbf16, #tpu.memory_space<vmem>>, vector<384x128xbf16>
    %cst_43 = arith.constant dense<0.000000e+00> : vector<128x128xf32>
    %72 = tpu.matmul %70, %71, %cst_43 {dimension_numbers = #tpu.dot_dimension_numbers<[1], [0], [0], [1], [0, 0, 1, 1], [], []>} : vector<128x384xbf16>, vector<384x128xbf16>, vector<128x128xf32> -> vector<128x128xf32>
    %c0_44 = arith.constant 0 : index
    %c0_45 = arith.constant 0 : index
    %73 = vector.load %arg8[%c0_44, %c0_45] : memref<1x128xf32, #tpu.memory_space<vmem>>, vector<1x128xf32>
    %74 = vector.broadcast %73 : vector<1x128xf32> to vector<128x128xf32>
    %75 = arith.addf %72, %74 : vector<128x128xf32>
    %76 = arith.addf %75, %1 : vector<128x128xf32>
    %c0_46 = arith.constant 0 : index
    %c0_47 = arith.constant 0 : index
    %c0_48 = arith.constant 0 : index
    %77 = vector.load %arg9[%c0_46, %c0_47, %c0_48] : memref<1x128x128xf32, #tpu.memory_space<vmem>>, vector<1x128x128xf32>
    %78 = vector.shape_cast %77 : vector<1x128x128xf32> to vector<128x128xf32>
    %79 = vector.shape_cast %76 : vector<128x128xf32> to vector<1x128x128xf32>
    tpu.vector_store %arg9[%c0_46, %c0_47, %c0_48], %79 {strides = array<i32>} : memref<1x128x128xf32, #tpu.memory_space<vmem>>, vector<1x128x128xf32>,
    return
  }
  func.func @transform_0(%arg0: i32, %arg1: i32) -> (i32, i32, i32) {
    %c0_i32 = arith.constant 0 : i32
    %c0_i32_0 = arith.constant 0 : i32
    return %arg0, %arg1, %c0_i32 : i32, i32, i32
  }
  func.func @transform_1(%arg0: i32, %arg1: i32) -> (i32, i32, i32) {
    %c16_i32 = arith.constant 16 : i32
    %0 = arith.muli %arg1, %c16_i32 : i32
    %c1_i32 = arith.constant 1 : i32
    %1 = arith.subi %0, %c1_i32 : i32
    %c0_i32 = arith.constant 0 : i32
    %2 = arith.maxsi %1, %c0_i32 : i32
    %c0_i32_0 = arith.constant 0 : i32
    %c0_i32_1 = arith.constant 0 : i32
    return %arg0, %2, %c0_i32_0 : i32, i32, i32
  }
  func.func @transform_2(%arg0: i32, %arg1: i32) -> (i32, i32, i32) {
    %c1_i32 = arith.constant 1 : i32
    %0 = arith.addi %arg1, %c1_i32 : i32
    %c16_i32 = arith.constant 16 : i32
    %1 = arith.muli %0, %c16_i32 : i32
    %c63_i32 = arith.constant 63 : i32
    %2 = arith.minsi %1, %c63_i32 : i32
    %c0_i32 = arith.constant 0 : i32
    %c0_i32_0 = arith.constant 0 : i32
    return %arg0, %2, %c0_i32 : i32, i32, i32
  }
  func.func @transform_3(%arg0: i32, %arg1: i32) -> (i32, i32) {
    %c0_i32 = arith.constant 0 : i32
    %c0_i32_0 = arith.constant 0 : i32
    %c0_i32_1 = arith.constant 0 : i32
    return %c0_i32, %c0_i32_0 : i32, i32
  }
  func.func @transform_4(%arg0: i32, %arg1: i32) -> (i32, i32) {
    %c0_i32 = arith.constant 0 : i32
    %c0_i32_0 = arith.constant 0 : i32
    %c0_i32_1 = arith.constant 0 : i32
    return %c0_i32, %c0_i32_0 : i32, i32
  }
  func.func @transform_5(%arg0: i32, %arg1: i32) -> (i32, i32) {
    %c0_i32 = arith.constant 0 : i32
    %c0_i32_0 = arith.constant 0 : i32
    %c0_i32_1 = arith.constant 0 : i32
    return %c0_i32, %c0_i32_0 : i32, i32
  }
  func.func @transform_6(%arg0: i32, %arg1: i32) -> (i32, i32) {
    %c0_i32 = arith.constant 0 : i32
    %c0_i32_0 = arith.constant 0 : i32
    %c0_i32_1 = arith.constant 0 : i32
    return %c0_i32, %c0_i32_0 : i32, i32
  }
  func.func @transform_7(%arg0: i32, %arg1: i32) -> (i32, i32, i32) {
    %c0_i32 = arith.constant 0 : i32
    %c0_i32_0 = arith.constant 0 : i32
    return %arg0, %arg1, %c0_i32 : i32, i32, i32
  }
}

</mosaic_0001>

<llo_original>
// kernel: tpu_custom_call.1
$region0: #{tpu_custom_call.1}
  #allocation0 [shape = 'u32[]', space=smem, size = 0x4, offset = 0x4, fixed_abs, tag = 'smem constant byte address 0x4 - core index']
  #allocation1 [shape = 'u32[144,128]{1,0:T(1,128)}', space=vmem, size = 0x12000, scoped, tag = 'internal scratch']
  #allocation2 [shape = 'f32[132,128]{1,0:T(8,128)}', space=vmem, size = 0x11000, scoped, tag = 'scratch operand']
  #allocation3 [shape = 'f32[130,128]{1,0:T(8,128)}', space=vmem, size = 0x11000, scoped, tag = 'scratch operand']
  %s0 = inlined_call_operand.hbm [shape: f32[2,512,128], index: 0, kind: input, shape index: {}]
  %s1 = inlined_call_operand.hbm [shape: f32[2,512,128], index: 1, kind: input, shape index: {}]
  %s2 = inlined_call_operand.hbm [shape: f32[2,512,128], index: 2, kind: input, shape index: {}]
  %s3 = inlined_call_operand.hbm [shape: bf16[384,128], index: 3, kind: input, shape index: {}]
  %s4 = inlined_call_operand.vmem [shape: f32[1,128], index: 4, kind: input, shape index: {}]
  %s5 = inlined_call_operand.hbm [shape: bf16[384,128], index: 5, kind: input, shape index: {}]
  %s6 = inlined_call_operand.vmem [shape: f32[1,128], index: 6, kind: input, shape index: {}]
  %s7 = inlined_call_operand.hbm [shape: f32[2,512,128], index: 7, kind: output, shape index: {}]
  %s8 = sld [smem:[#allocation0]]
  $region81: #{tpu_custom_call.1} parent=0
    _
  %s10 = ssub.s32 1, %s8
  %s11 = scalar_select 0, %s10, %s8
  $region1: #{tpu_custom_call.1} parent=0
    #allocation4 [shape = 'u8[131072]{0}', space=vmem, size = 0x20000, scoped, tag = 'input window, operand 0']
    #allocation5 [shape = 's32[2]{0}', space=sflag, size = 0x8, scoped, tag = 'scoped memory for tpu_custom_call.1']
    #allocation6 [shape = 's32[2]{0}', space=sflag, size = 0x8, scoped, tag = 'scoped memory for tpu_custom_call.1']
    #allocation7 [shape = 'u8[8192]{0}', space=vmem, size = 0x2000, scoped, tag = 'input window, operand 1']
    #allocation8 [shape = 's32[2]{0}', space=sflag, size = 0x8, scoped, tag = 'scoped memory for tpu_custom_call.1']
    #allocation9 [shape = 'u8[8192]{0}', space=vmem, size = 0x2000, scoped, tag = 'input window, operand 2']
    #allocation10 [shape = 'u8[98304]{0}', space=vmem, size = 0x18000, scoped, tag = 'input window, operand 3, single buffered']
    #allocation11 [shape = 's32[1]{0}', space=sflag, size = 0x4, scoped, tag = 'scoped memory for tpu_custom_call.1']
    #allocation12 [shape = 'u8[98304]{0}', space=vmem, size = 0x18000, scoped, tag = 'input window, operand 5, single buffered']
    #allocation13 [shape = 'u8[131072]{0}', space=vmem, size = 0x20000, scoped, tag = 'output window, operand 0']
    %12 = vsyncpa [#allocation5], 0
    %s13 = scalar_lea.sflag [#allocation5], 1
    %14 = vsyncpa %s13, 0
    %15 = vsyncpa [#allocation8], 0
    %s16 = scalar_lea.sflag [#allocation8], 1
    %17 = vsyncpa %s16, 0
    %18 = vsyncpa [#allocation11], 0
    %19 = vsyncpa [#allocation6], 0
    %s20 = scalar_lea.sflag [#allocation6], 1
    %21 = vsyncpa %s20, 0
    loop: start=0, step=1, limit=10
    $region2: #{tpu_custom_call.1} parent=1 // loop_pre_header
      _
    $region3: #{tpu_custom_call.1} parent=1 // loop_header
      %s23 = sphi 0, %s27
      %p24 = scmp.ge.s32.totalorder %s23, 10
      %s30 = sphi 0, %s42
      %s31 = sphi 0, %s38
      %s32 = sphi 0, %s30
      %s33 = sphi 0, %s31
      %s34 = sphi 0, %s32
      %s35 = sphi 0, %s33
      %s47 = sphi 0, %s49
      %s50 = sphi 0, %s47
      %s51 = sphi 0, %s50
      %s67 = sphi 0, %s51
      %s83 = sphi 0, %s85
      %s86 = sphi 0, %s83
      %s87 = sphi 0, %s86
      %s103 = sphi 0, %s87
      %s119 = sphi 0, %s121
      %s122 = sphi 0, %s119
      %s123 = sphi 0, %s122
      %s139 = sphi 0, %s123
      %s143 = sphi 0, %s143
      %s145 = sphi 0, %s143
      %s146 = sphi 0, %s145
      %s160 = sphi 0, %s146
      %s164 = sphi 0, %s164
      %s166 = sphi 0, %s164
      %s167 = sphi 0, %s166
      %s181 = sphi 0, %s167
      %s185 = sphi 0, %s185
      %s187 = sphi 0, %s185
      %s188 = sphi 0, %s187
      %s202 = sphi 0, %s188
      %s206 = sphi 0, %s206
      %s208 = sphi 0, %s206
      %s209 = sphi 0, %s208
      %s223 = sphi 0, %s209
      %s231 = sphi 0, %s233
      %s234 = sphi 0, %s231
      %s235 = sphi 0, %s234
      %s251 = sphi 0, %s235
    $region4: #{tpu_custom_call.1} parent=1 // loop_header_branch
      %26 = sbr.rel (%p24) target = $region8
    $region5: #{tpu_custom_call.1} parent=1 // loop_body
      %s28 = ssub.s32 %s23, 1
      %s29 = ssub.s32 %s23, 2
      %s36 = sadd.s32 1, %s31
      %p37 = scmp.ge.s32.totalorder %s36, 4
      %s38 = scalar_select %p37, 0, %s36
      %s39 = sadd.s32 1, %s30
      %s40 = scalar_select %p37, %s39, %s30
      %p41 = scmp.ge.s32.totalorder %s40, 2
      %s42 = scalar_select %p41, 0, %s40
      %s43 = ssub.s32 %s30, %s42
      %s44 = ssub.s32 %s31, %s38
      %s45 = sor.u32 %s43, %s44
      %p46 = scmp.eq.s32.totalorder %s45, 0
      %s48 = sadd.s32 %s47, 1
      %s49 = scalar_select %p46, %s47, %s48
      %p52 = pneg %p46
      %p53 = scmp.eq.s32.totalorder %s23, 7
      %p54 = por %p52, %p53
      %p55 = scmp.ne.s32.totalorder %s47, %s50
      %p56 = scmp.eq.s32.totalorder %s23, 0
      %p57 = por %p55, %p56
      %p58 = scmp.ne.s32.totalorder %s47, %s50
      %p59 = scmp.eq.s32.totalorder %s28, 7
      %p60 = por %p58, %p59
      %p61 = scmp.ne.s32.totalorder %s50, %s51
      %p62 = scmp.eq.s32.totalorder %s28, 0
      %p63 = por %p61, %p62
      %p64 = scmp.ne.s32.totalorder %s50, %s51
      %p65 = scmp.eq.s32.totalorder %s29, 7
      %p66 = por %p64, %p65
      %p68 = scmp.ne.s32.totalorder %s51, %s67
      %p69 = scmp.eq.s32.totalorder %s29, 0
      %p70 = por %p68, %p69
      %s71 = smul.u32 %s31, 16
      %s72 = ssub.s32 %s71, 1
      %p73 = scmp.gt.s32.totalorder %s72, 0
      %s74 = scalar_select %p73, %s72, 0
      %s75 = smul.u32 %s38, 16
      %s76 = ssub.s32 %s75, 1
      %p77 = scmp.gt.s32.totalorder %s76, 0
      %s78 = scalar_select %p77, %s76, 0
      %s79 = ssub.s32 %s30, %s42
      %s80 = ssub.s32 %s74, %s78
      %s81 = sor.u32 %s79, %s80
      %p82 = scmp.eq.s32.totalorder %s81, 0
      %s84 = sadd.s32 %s83, 1
      %s85 = scalar_select %p82, %s83, %s84
      %p88 = pneg %p82
      %p89 = scmp.eq.s32.totalorder %s23, 7
      %p90 = por %p88, %p89
      %p91 = scmp.ne.s32.totalorder %s83, %s86
      %p92 = scmp.eq.s32.totalorder %s23, 0
      %p93 = por %p91, %p92
      %p94 = scmp.ne.s32.totalorder %s83, %s86
      %p95 = scmp.eq.s32.totalorder %s28, 7
      %p96 = por %p94, %p95
      %p97 = scmp.ne.s32.totalorder %s86, %s87
      %p98 = scmp.eq.s32.totalorder %s28, 0
      %p99 = por %p97, %p98
      %p100 = scmp.ne.s32.totalorder %s86, %s87
      %p101 = scmp.eq.s32.totalorder %s29, 7
      %p102 = por %p100, %p101
      %p104 = scmp.ne.s32.totalorder %s87, %s103
      %p105 = scmp.eq.s32.totalorder %s29, 0
      %p106 = por %p104, %p105
      %s107 = sadd.s32 %s31, 1
      %s108 = smul.u32 %s107, 16
      %p109 = scmp.lt.s32.totalorder %s108, 63
      %s110 = scalar_select %p109, %s108, 63
      %s111 = sadd.s32 %s38, 1
      %s112 = smul.u32 %s111, 16
      %p113 = scmp.lt.s32.totalorder %s112, 63
      %s114 = scalar_select %p113, %s112, 63
      %s115 = ssub.s32 %s30, %s42
      %s116 = ssub.s32 %s110, %s114
      %s117 = sor.u32 %s115, %s116
      %p118 = scmp.eq.s32.totalorder %s117, 0
      %s120 = sadd.s32 %s119, 1
      %s121 = scalar_select %p118, %s119, %s120
      %p124 = pneg %p118
      %p125 = scmp.eq.s32.totalorder %s23, 7
      %p126 = por %p124, %p125
      %p127 = scmp.ne.s32.totalorder %s119, %s122
      %p128 = scmp.eq.s32.totalorder %s23, 0
      %p129 = por %p127, %p128
      %p130 = scmp.ne.s32.totalorder %s119, %s122
      %p131 = scmp.eq.s32.totalorder %s28, 7
      %p132 = por %p130, %p131
      %p133 = scmp.ne.s32.totalorder %s122, %s123
      %p134 = scmp.eq.s32.totalorder %s28, 0
      %p135 = por %p133, %p134
      %p136 = scmp.ne.s32.totalorder %s122, %s123
      %p137 = scmp.eq.s32.totalorder %s29, 7
      %p138 = por %p136, %p137
      %p140 = scmp.ne.s32.totalorder %s123, %s139
      %p141 = scmp.eq.s32.totalorder %s29, 0
      %p142 = por %p140, %p141
      %s144 = sadd.s32 %s143, 1
      %p147 = scmp.eq.s32.totalorder %s23, 7
      %p148 = scmp.ne.s32.totalorder %s143, %s145
      %p149 = scmp.eq.s32.totalorder %s23, 0
      %p150 = por %p148, %p149
      %p151 = scmp.ne.s32.totalorder %s143, %s145
      %p152 = scmp.eq.s32.totalorder %s28, 7
      %p153 = por %p151, %p152
      %p154 = scmp.ne.s32.totalorder %s145, %s146
      %p155 = scmp.eq.s32.totalorder %s28, 0
      %p156 = por %p154, %p155
      %p157 = scmp.ne.s32.totalorder %s145, %s146
      %p158 = scmp.eq.s32.totalorder %s29, 7
      %p159 = por %p157, %p158
      %p161 = scmp.ne.s32.totalorder %s146, %s160
      %p162 = scmp.eq.s32.totalorder %s29, 0
      %p163 = por %p161, %p162
      %s165 = sadd.s32 %s164, 1
      %p168 = scmp.eq.s32.totalorder %s23, 7
      %p169 = scmp.ne.s32.totalorder %s164, %s166
      %p170 = scmp.eq.s32.totalorder %s23, 0
      %p171 = por %p169, %p170
      %p172 = scmp.ne.s32.totalorder %s164, %s166
      %p173 = scmp.eq.s32.totalorder %s28, 7
      %p174 = por %p172, %p173
      %p175 = scmp.ne.s32.totalorder %s166, %s167
      %p176 = scmp.eq.s32.totalorder %s28, 0
      %p177 = por %p175, %p176
      %p178 = scmp.ne.s32.totalorder %s166, %s167
      %p179 = scmp.eq.s32.totalorder %s29, 7
      %p180 = por %p178, %p179
      %p182 = scmp.ne.s32.totalorder %s167, %s181
      %p183 = scmp.eq.s32.totalorder %s29, 0
      %p184 = por %p182, %p183
      %s186 = sadd.s32 %s185, 1
      %p189 = scmp.eq.s32.totalorder %s23, 7
      %p190 = scmp.ne.s32.totalorder %s185, %s187
      %p191 = scmp.eq.s32.totalorder %s23, 0
      %p192 = por %p190, %p191
      %p193 = scmp.ne.s32.totalorder %s185, %s187
      %p194 = scmp.eq.s32.totalorder %s28, 7
      %p195 = por %p193, %p194
      %p196 = scmp.ne.s32.totalorder %s187, %s188
      %p197 = scmp.eq.s32.totalorder %s28, 0
      %p198 = por %p196, %p197
      %p199 = scmp.ne.s32.totalorder %s187, %s188
      %p200 = scmp.eq.s32.totalorder %s29, 7
      %p201 = por %p199, %p200
      %p203 = scmp.ne.s32.totalorder %s188, %s202
      %p204 = scmp.eq.s32.totalorder %s29, 0
      %p205 = por %p203, %p204
      %s207 = sadd.s32 %s206, 1
      %p210 = scmp.eq.s32.totalorder %s23, 7
      %p211 = scmp.ne.s32.totalorder %s206, %s208
      %p212 = scmp.eq.s32.totalorder %s23, 0
      %p213 = por %p211, %p212
      %p214 = scmp.ne.s32.totalorder %s206, %s208
      %p215 = scmp.eq.s32.totalorder %s28, 7
      %p216 = por %p214, %p215
      %p217 = scmp.ne.s32.totalorder %s208, %s209
      %p218 = scmp.eq.s32.totalorder %s28, 0
      %p219 = por %p217, %p218
      %p220 = scmp.ne.s32.totalorder %s208, %s209
      %p221 = scmp.eq.s32.totalorder %s29, 7
      %p222 = por %p220, %p221
      %p224 = scmp.ne.s32.totalorder %s209, %s223
      %p225 = scmp.eq.s32.totalorder %s29, 0
      %p226 = por %p224, %p225
      %s227 = ssub.s32 %s30, %s42
      %s228 = ssub.s32 %s31, %s38
      %s229 = sor.u32 %s227, %s228
      %p230 = scmp.eq.s32.totalorder %s229, 0
      %s232 = sadd.s32 %s231, 1
      %s233 = scalar_select %p230, %s231, %s232
      %p236 = pneg %p230
      %p237 = scmp.eq.s32.totalorder %s23, 7
      %p238 = por %p236, %p237
      %p239 = scmp.ne.s32.totalorder %s231, %s234
      %p240 = scmp.eq.s32.totalorder %s23, 0
      %p241 = por %p239, %p240
      %p242 = scmp.ne.s32.totalorder %s231, %s234
      %p243 = scmp.eq.s32.totalorder %s28, 7
      %p244 = por %p242, %p243
      %p245 = scmp.ne.s32.totalorder %s234, %s235
      %p246 = scmp.eq.s32.totalorder %s28, 0
      %p247 = por %p245, %p246
      %p248 = scmp.ne.s32.totalorder %s234, %s235
      %p249 = scmp.eq.s32.totalorder %s29, 7
      %p250 = por %p248, %p249
      %p252 = scmp.ne.s32.totalorder %s235, %s251
      %p253 = scmp.eq.s32.totalorder %s29, 0
      %p254 = por %p252, %p253
      %p255 = scmp.le.s32.totalorder 1, %s23
      %p256 = scmp.lt.s32.totalorder %s23, 9
      %p257 = pnand %p255, %p256
      %p258 = pneg %p257
      // Predicated region
      $region9: #{tpu_custom_call.1} parent=5 // pred_check
        _
      $region10: #{tpu_custom_call.1} parent=5 // pred_check_branch
        %260 = sbr.rel (%p257) target = $region12
      $region11: #{tpu_custom_call.1} parent=5 // pred_region
        %s261 = ssub.s32 %s23, 1
        // Predicated region
        $region13: #{tpu_custom_call.1} parent=11 // pred_check
          %p262 = pneg %p156
        $region14: #{tpu_custom_call.1} parent=11 // pred_check_branch
          %264 = sbr.rel (%p262) target = $region16
        $region15: #{tpu_custom_call.1} parent=11 // pred_region
          %s266 = ssub.s32 3072, 3072
          %267 = vsyncadd [#allocation11], %s266
          %s268 = sshll.u32 [#allocation10], 4
          %s269 = int_to_ptr.vmem [resolvable:$true] %s268
          %274 = dma.hbm_to_vmem [thread:$0]  %s3, 3072, %s269, [#allocation11], 64, 64, 4
        $region16: #{tpu_custom_call.1} parent=11 // pred_fallthru
          _
        // Predicated region
        $region17: #{tpu_custom_call.1} parent=11 // pred_check
          %p275 = pneg %p177
        $region18: #{tpu_custom_call.1} parent=11 // pred_check_branch
          %277 = sbr.rel (%p275) target = $region20
        $region19: #{tpu_custom_call.1} parent=11 // pred_region
          _
        $region20: #{tpu_custom_call.1} parent=11 // pred_fallthru
          _
        // Predicated region
        $region21: #{tpu_custom_call.1} parent=11 // pred_check
          %p278 = pneg %p198
        $region22: #{tpu_custom_call.1} parent=11 // pred_check_branch
          %280 = sbr.rel (%p278) target = $region24
        $region23: #{tpu_custom_call.1} parent=11 // pred_region
          %s282 = ssub.s32 3072, 3072
          %283 = vsyncadd [#allocation11], %s282
          %s284 = sshll.u32 [#allocation12], 4
          %s285 = int_to_ptr.vmem [resolvable:$true] %s284
          %290 = dma.hbm_to_vmem [thread:$0]  %s5, 3072, %s285, [#allocation11], 64, 64, 4
        $region24: #{tpu_custom_call.1} parent=11 // pred_fallthru
          _
        // Predicated region
        $region25: #{tpu_custom_call.1} parent=11 // pred_check
          %p291 = pneg %p219
        $region26: #{tpu_custom_call.1} parent=11 // pred_check_branch
          %293 = sbr.rel (%p291) target = $region28
        $region27: #{tpu_custom_call.1} parent=11 // pred_region
          _
        $region28: #{tpu_custom_call.1} parent=11 // pred_fallthru
          _
      $region12: #{tpu_custom_call.1} parent=5 // pred_fallthru
        _
      %p294 = scmp.lt.s32.totalorder %s23, 8
      // Predicated region
      $region29: #{tpu_custom_call.1} parent=5 // pred_check
        %p295 = pneg %p294
      $region30: #{tpu_custom_call.1} parent=5 // pred_check_branch
        %297 = sbr.rel (%p295) target = $region32
      $region31: #{tpu_custom_call.1} parent=5 // pred_region
        // Predicated region
        $region33: #{tpu_custom_call.1} parent=31 // pred_check
          %p298 = pneg %p57
        $region34: #{tpu_custom_call.1} parent=31 // pred_check_branch
          %300 = sbr.rel (%p298) target = $region36
        $region35: #{tpu_custom_call.1} parent=31 // pred_region
          %s301 = sand.u32 %s47, 1
          %s302 = scalar_lea.sflag [#allocation5], %s301
          %s303 = sand.u32 %s47, 1
          %s304 = smul.addr %s303, 128
          %s305 = scalar_lea.vmem [#allocation4], %s304
          %s306 = smul.u32 16, %s31
          %s308 = ssub.s32 2048, 2048
          %309 = vsyncadd %s302, %s308
          %s310 = smul.addr %s30, 64
          %s311 = sadd.s32 %s306, %s310
          %s312 = smul.addr %s311, 128
          %s313 = scalar_lea.hbm %s0, %s312
          %s314 = sshll.u32 %s305, 4
          %s315 = int_to_ptr.vmem [resolvable:$true] %s314
          %320 = dma.hbm_to_vmem [thread:$0]  %s313, 2048, %s315, %s302, 128, 128, 8
        $region36: #{tpu_custom_call.1} parent=31 // pred_fallthru
          _
        // Predicated region
        $region37: #{tpu_custom_call.1} parent=31 // pred_check
          %p321 = pneg %p93
        $region38: #{tpu_custom_call.1} parent=31 // pred_check_branch
          %323 = sbr.rel (%p321) target = $region40
        $region39: #{tpu_custom_call.1} parent=31 // pred_region
          %s324 = sand.u32 %s23, 1
          %s325 = scalar_lea.sflag [#allocation8], %s324
          %s326 = sand.u32 %s83, 1
          %s327 = smul.addr %s326, 8
          %s328 = scalar_lea.vmem [#allocation7], %s327
          %s329 = smul.u32 %s31, 16
          %s330 = ssub.s32 %s329, 1
          %p331 = scmp.gt.s32.totalorder %s330, 0
          %s332 = scalar_select %p331, %s330, 0
          %s334 = ssub.s32 128, 128
          %335 = vsyncadd %s325, %s334
          %s336 = smul.addr %s30, 64
          %s337 = sadd.s32 %s332, %s336
          %s338 = smul.addr %s337, 128
          %s339 = scalar_lea.hbm %s1, %s338
          %s341 = sshll.u32 %s328, 4
          %s342 = int_to_ptr.vmem [resolvable:$true] %s341
          %344 = dma.hbm_to_vmem [thread:$0]  %s339, 128, %s342, %s325
        $region40: #{tpu_custom_call.1} parent=31 // pred_fallthru
          _
        // Predicated region
        $region41: #{tpu_custom_call.1} parent=31 // pred_check
          %p345 = pneg %p129
        $region42: #{tpu_custom_call.1} parent=31 // pred_check_branch
          %347 = sbr.rel (%p345) target = $region44
        $region43: #{tpu_custom_call.1} parent=31 // pred_region
          %s348 = sand.u32 %s23, 1
          %s349 = scalar_lea.sflag [#allocation8], %s348
          %s350 = sand.u32 %s119, 1
          %s351 = smul.addr %s350, 8
          %s352 = scalar_lea.vmem [#allocation9], %s351
          %s353 = sadd.s32 %s31, 1
          %s354 = smul.u32 %s353, 16
          %p355 = scmp.lt.s32.totalorder %s354, 63
          %s356 = scalar_select %p355, %s354, 63
          %s358 = ssub.s32 128, 128
          %359 = vsyncadd %s349, %s358
          %s360 = smul.addr %s30, 64
          %s361 = sadd.s32 %s356, %s360
          %s362 = smul.addr %s361, 128
          %s363 = scalar_lea.hbm %s2, %s362
          %s365 = sshll.u32 %s352, 4
          %s366 = int_to_ptr.vmem [resolvable:$true] %s365
          %368 = dma.hbm_to_vmem [thread:$0]  %s363, 128, %s366, %s349
        $region44: #{tpu_custom_call.1} parent=31 // pred_fallthru
          _
      $region32: #{tpu_custom_call.1} parent=5 // pred_fallthru
        _
      %p369 = scmp.le.s32.totalorder 1, %s23
      %p370 = scmp.lt.s32.totalorder %s23, 9
      %p371 = pnand %p369, %p370
      %p372 = pneg %p371
      // Predicated region
      $region45: #{tpu_custom_call.1} parent=5 // pred_check
        _
      $region46: #{tpu_custom_call.1} parent=5 // pred_check_branch
        %374 = sbr.rel (%p371) target = $region48
      $region47: #{tpu_custom_call.1} parent=5 // pred_region
        %s375 = ssub.s32 %s23, 1
        %s376 = sand.u32 %s50, 1
        %s377 = scalar_lea.sflag [#allocation5], %s376
        %s378 = sand.u32 %s50, 1
        %s379 = smul.addr %s378, 128
        %s380 = scalar_lea.vmem [#allocation4], %s379
        // Predicated region
        $region49: #{tpu_custom_call.1} parent=47 // pred_check
          %p381 = pneg %p63
        $region50: #{tpu_custom_call.1} parent=47 // pred_check_branch
          %383 = sbr.rel (%p381) target = $region52
        $region51: #{tpu_custom_call.1} parent=47 // pred_region
          %384 = dma.done %s377, 2048
        $region52: #{tpu_custom_call.1} parent=47 // pred_fallthru
          _
        %s385 = sand.u32 %s28, 1
        %s386 = scalar_lea.sflag [#allocation8], %s385
        %s387 = sand.u32 %s86, 1
        %s388 = smul.addr %s387, 8
        %s389 = scalar_lea.vmem [#allocation7], %s388
        // Predicated region
        $region53: #{tpu_custom_call.1} parent=47 // pred_check
          %p390 = pneg %p99
        $region54: #{tpu_custom_call.1} parent=47 // pred_check_branch
          %392 = sbr.rel (%p390) target = $region56
        $region55: #{tpu_custom_call.1} parent=47 // pred_region
          %393 = dma.done %s386, 128
        $region56: #{tpu_custom_call.1} parent=47 // pred_fallthru
          _
        %s394 = sand.u32 %s28, 1
        %s395 = scalar_lea.sflag [#allocation8], %s394
        %s396 = sand.u32 %s122, 1
        %s397 = smul.addr %s396, 8
        %s398 = scalar_lea.vmem [#allocation9], %s397
        // Predicated region
        $region57: #{tpu_custom_call.1} parent=47 // pred_check
          %p399 = pneg %p135
        $region58: #{tpu_custom_call.1} parent=47 // pred_check_branch
          %401 = sbr.rel (%p399) target = $region60
        $region59: #{tpu_custom_call.1} parent=47 // pred_region
          %402 = dma.done %s395, 128
        $region60: #{tpu_custom_call.1} parent=47 // pred_fallthru
          _
        // Predicated region
        $region61: #{tpu_custom_call.1} parent=47 // pred_check
          %p403 = pneg %p156
        $region62: #{tpu_custom_call.1} parent=47 // pred_check_branch
          %405 = sbr.rel (%p403) target = $region64
        $region63: #{tpu_custom_call.1} parent=47 // pred_region
          %406 = dma.done [#allocation11], 3072
        $region64: #{tpu_custom_call.1} parent=47 // pred_fallthru
          _
        // Predicated region
        $region65: #{tpu_custom_call.1} parent=47 // pred_check
          %p407 = pneg %p198
        $region66: #{tpu_custom_call.1} parent=47 // pred_check_branch
          %409 = sbr.rel (%p407) target = $region68
        $region67: #{tpu_custom_call.1} parent=47 // pred_region
          %410 = dma.done [#allocation11], 3072
        $region68: #{tpu_custom_call.1} parent=47 // pred_fallthru
          _
        %s411 = sand.u32 %s50, 1
        %s412 = scalar_lea.sflag [#allocation5], %s411
        %s413 = sand.u32 %s50, 1
        %s414 = smul.addr %s413, 128
        %s415 = scalar_lea.vmem [#allocation4], %s414
        %p416 = pneg %p63
        %p417 = pneg %p60
        %s418 = sand.u32 %s28, 1
        %s419 = scalar_lea.sflag [#allocation8], %s418
        %s420 = sand.u32 %s86, 1
        %s421 = smul.addr %s420, 8
        %s422 = scalar_lea.vmem [#allocation7], %s421
        %p423 = pneg %p99
        %p424 = pneg %p96
        %s425 = sand.u32 %s28, 1
        %s426 = scalar_lea.sflag [#allocation8], %s425
        %s427 = sand.u32 %s122, 1
        %s428 = smul.addr %s427, 8
        %s429 = scalar_lea.vmem [#allocation9], %s428
        %p430 = pneg %p135
        %p431 = pneg %p132
        %p432 = pneg %p156
        %p433 = pneg %p153
        %p434 = pneg %p177
        %p435 = pneg %p174
        %p436 = pneg %p198
        %p437 = pneg %p195
        %p438 = pneg %p219
        %p439 = pneg %p216
        %p440 = pneg %p247
        %p441 = pneg %p244
        %s442 = sand.u32 %s234, 1
        %s443 = scalar_lea.sflag [#allocation6], %s442
        %s444 = sand.u32 %s234, 1
        %s445 = smul.addr %s444, 128
        %s446 = scalar_lea.vmem [#allocation13], %s445
        %s447 = smul.u32 16, %s33
        %s448 = smul.u32 %s33, 16
        %s449 = ssub.s32 %s448, 1
        %p450 = scmp.gt.s32.totalorder %s449, 0
        %s451 = scalar_select %p450, %s449, 0
        %s452 = sadd.s32 %s33, 1
        %s453 = smul.u32 %s452, 16
        %p454 = scmp.lt.s32.totalorder %s453, 63
        %s455 = scalar_select %p454, %s453, 63
        %s456 = smul.u32 16, %s33
        %v458 = vld [vmem:[%s380] sm:$0xff]
        %v459 = vld [vmem:[%s380 + $0x8] sm:$0xff]
        %v460 = vld [vmem:[%s380 + $0x10] sm:$0xff]
        %v461 = vld [vmem:[%s380 + $0x18] sm:$0xff]
        %v462 = vld [vmem:[%s380 + $0x20] sm:$0xff]
        %v463 = vld [vmem:[%s380 + $0x28] sm:$0xff]
        %v464 = vld [vmem:[%s380 + $0x30] sm:$0xff]
        %v465 = vld [vmem:[%s380 + $0x38] sm:$0xff]
        %v466 = vld [vmem:[%s380 + $0x40] sm:$0xff]
        %v467 = vld [vmem:[%s380 + $0x48] sm:$0xff]
        %v468 = vld [vmem:[%s380 + $0x50] sm:$0xff]
        %v469 = vld [vmem:[%s380 + $0x58] sm:$0xff]
        %v470 = vld [vmem:[%s380 + $0x60] sm:$0xff]
        %v471 = vld [vmem:[%s380 + $0x68] sm:$0xff]
        %v472 = vld [vmem:[%s380 + $0x70] sm:$0xff]
        %v473 = vld [vmem:[%s380 + $0x78] sm:$0xff]
        %v474 = vld [vmem:[%s389] sm:$0xff]
        %v475 = vld [vmem:[%s398] sm:$0xff]
        %p476 = scmp.eq.s32.totalorder %s33, 0
        %s477 = scalar_select %p476, 1, 0
        %v478 = vstv %s477
        %vm479 = vcmp.eq.s32.totalorder %v478, 1
        %v480 = vsel %vm479, 0.0, %v474
        %p481 = scmp.eq.s32.totalorder %s33, 3
        %s482 = scalar_select %p481, 1, 0
        %v483 = vstv %s482
        %vm484 = vcmp.eq.s32.totalorder %v483, 1
        %v485 = vsel %vm484, 0.0, %v475
        %vm486 = vcmp.gt.f32.partialorder %v480, 0.0
        %v487 = vmul.f32 %v480, 0.1
        %v488 = vsel %vm486, %v480, %v487
        %489 = vst [vmem:[#allocation2 - $0x6] sm:$0xc0] %v488
        %vm490 = vcmp.gt.f32.partialorder %v458, 0.0
        %vm491 = vcmp.gt.f32.partialorder %v459, 0.0
        %vm492 = vcmp.gt.f32.partialorder %v460, 0.0
        %vm493 = vcmp.gt.f32.partialorder %v461, 0.0
        %vm494 = vcmp.gt.f32.partialorder %v462, 0.0
        %vm495 = vcmp.gt.f32.partialorder %v463, 0.0
        %vm496 = vcmp.gt.f32.partialorder %v464, 0.0
        %vm497 = vcmp.gt.f32.partialorder %v465, 0.0
        %vm498 = vcmp.gt.f32.partialorder %v466, 0.0
        %vm499 = vcmp.gt.f32.partialorder %v467, 0.0
        %vm500 = vcmp.gt.f32.partialorder %v468, 0.0
        %vm501 = vcmp.gt.f32.partialorder %v469, 0.0
        %vm502 = vcmp.gt.f32.partialorder %v470, 0.0
        %vm503 = vcmp.gt.f32.partialorder %v471, 0.0
        %vm504 = vcmp.gt.f32.partialorder %v472, 0.0
        %vm505 = vcmp.gt.f32.partialorder %v473, 0.0
        %v506 = vmul.f32 %v458, 0.1
        %v507 = vmul.f32 %v459, 0.1
        %v508 = vmul.f32 %v460, 0.1
        %v509 = vmul.f32 %v461, 0.1
        %v510 = vmul.f32 %v462, 0.1
        %v511 = vmul.f32 %v463, 0.1
        %v512 = vmul.f32 %v464, 0.1
        %v513 = vmul.f32 %v465, 0.1
        %v514 = vmul.f32 %v466, 0.1
        %v515 = vmul.f32 %v467, 0.1
        %v516 = vmul.f32 %v468, 0.1
        %v517 = vmul.f32 %v469, 0.1
        %v518 = vmul.f32 %v470, 0.1
        %v519 = vmul.f32 %v471, 0.1
        %v520 = vmul.f32 %v472, 0.1
        %v521 = vmul.f32 %v473, 0.1
        %v522 = vsel %vm490, %v458, %v506
        %v523 = vsel %vm491, %v459, %v507
        %v524 = vsel %vm492, %v460, %v508
        %v525 = vsel %vm493, %v461, %v509
        %v526 = vsel %vm494, %v462, %v510
        %v527 = vsel %vm495, %v463, %v511
        %v528 = vsel %vm496, %v464, %v512
        %v529 = vsel %vm497, %v465, %v513
        %v530 = vsel %vm498, %v466, %v514
        %v531 = vsel %vm499, %v467, %v515
        %v532 = vsel %vm500, %v468, %v516
        %v533 = vsel %vm501, %v469, %v517
        %v534 = vsel %vm502, %v470, %v518
        %v535 = vsel %vm503, %v471, %v519
        %v536 = vsel %vm504, %v472, %v520
        %v537 = vsel %vm505, %v473, %v521
        %538 = vst [vmem:[#allocation2 + $0x2] sm:$0xff] %v522
        %539 = vst [vmem:[#allocation2 + $0xa] sm:$0xff] %v523
        %540 = vst [vmem:[#allocation2 + $0x12] sm:$0xff] %v524
        %541 = vst [vmem:[#allocation2 + $0x1a] sm:$0xff] %v525
        %542 = vst [vmem:[#allocation2 + $0x22] sm:$0xff] %v526
        %543 = vst [vmem:[#allocation2 + $0x2a] sm:$0xff] %v527
        %544 = vst [vmem:[#allocation2 + $0x32] sm:$0xff] %v528
        %545 = vst [vmem:[#allocation2 + $0x3a] sm:$0xff] %v529
        %546 = vst [vmem:[#allocation2 + $0x42] sm:$0xff] %v530
        %547 = vst [vmem:[#allocation2 + $0x4a] sm:$0xff] %v531
        %548 = vst [vmem:[#allocation2 + $0x52] sm:$0xff] %v532
        %549 = vst [vmem:[#allocation2 + $0x5a] sm:$0xff] %v533
        %550 = vst [vmem:[#allocation2 + $0x62] sm:$0xff] %v534
        %551 = vst [vmem:[#allocation2 + $0x6a] sm:$0xff] %v535
        %552 = vst [vmem:[#allocation2 + $0x72] sm:$0xff] %v536
        %553 = vst [vmem:[#allocation2 + $0x7a] sm:$0xff] %v537
        %vm554 = vcmp.gt.f32.partialorder %v485, 0.0
        %v555 = vmul.f32 %v485, 0.1
        %v556 = vsel %vm554, %v485, %v555
        %557 = vst [vmem:[#allocation2 + $0x82] sm:$0x3] %v556
        %v558 = vld [vmem:[#allocation2] sm:$0xff]
        %v559 = vld [vmem:[#allocation2 + $0x8] sm:$0xff]
        %v560 = vld [vmem:[#allocation2 + $0x10] sm:$0xff]
        %v561 = vld [vmem:[#allocation2 + $0x18] sm:$0xff]
        %v562 = vld [vmem:[#allocation2 + $0x20] sm:$0xff]
        %v563 = vld [vmem:[#allocation2 + $0x28] sm:$0xff]
        %v564 = vld [vmem:[#allocation2 + $0x30] sm:$0xff]
        %v565 = vld [vmem:[#allocation2 + $0x38] sm:$0xff]
        %v566 = vld [vmem:[#allocation2 + $0x40] sm:$0xff]
        %v567 = vld [vmem:[#allocation2 + $0x48] sm:$0xff]
        %v568 = vld [vmem:[#allocation2 + $0x50] sm:$0xff]
        %v569 = vld [vmem:[#allocation2 + $0x58] sm:$0xff]
        %v570 = vld [vmem:[#allocation2 + $0x60] sm:$0xff]
        %v571 = vld [vmem:[#allocation2 + $0x68] sm:$0xff]
        %v572 = vld [vmem:[#allocation2 + $0x70] sm:$0xff]
        %v573 = vld [vmem:[#allocation2 + $0x78] sm:$0xff]
        %v574 = vld [vmem:[#allocation2 + $0x80] sm:$0x3]
        %v575 = vpack.c.bf16 %v559, %v558
        %v576 = vpack.c.bf16 %v561, %v560
        %v577 = vpack.c.bf16 %v563, %v562
        %v578 = vpack.c.bf16 %v565, %v564
        %v579 = vpack.c.bf16 %v567, %v566
        %v580 = vpack.c.bf16 %v569, %v568
        %v581 = vpack.c.bf16 %v571, %v570
        %v582 = vpack.c.bf16 %v573, %v572
        %v583 = vpack.c.bf16 %v574, %v574
        %v584 = vld [vmem:[#allocation2 + $0x1] sm:$0xff]
        %v585 = vld [vmem:[#allocation2 + $0x9] sm:$0xff]
        %v586 = vld [vmem:[#allocation2 + $0x11] sm:$0xff]
        %v587 = vld [vmem:[#allocation2 + $0x19] sm:$0xff]
        %v588 = vld [vmem:[#allocation2 + $0x21] sm:$0xff]
        %v589 = vld [vmem:[#allocation2 + $0x29] sm:$0xff]
        %v590 = vld [vmem:[#allocation2 + $0x31] sm:$0xff]
        %v591 = vld [vmem:[#allocation2 + $0x39] sm:$0xff]
        %v592 = vld [vmem:[#allocation2 + $0x41] sm:$0xff]
        %v593 = vld [vmem:[#allocation2 + $0x49] sm:$0xff]
        %v594 = vld [vmem:[#allocation2 + $0x51] sm:$0xff]
        %v595 = vld [vmem:[#allocation2 + $0x59] sm:$0xff]
        %v596 = vld [vmem:[#allocation2 + $0x61] sm:$0xff]
        %v597 = vld [vmem:[#allocation2 + $0x69] sm:$0xff]
        %v598 = vld [vmem:[#allocation2 + $0x71] sm:$0xff]
        %v599 = vld [vmem:[#allocation2 + $0x79] sm:$0xff]
        %v600 = vld [vmem:[#allocation2 + $0x81] sm:$0x3]
        %v601 = vpack.c.bf16 %v585, %v584
        %v602 = vpack.c.bf16 %v587, %v586
        %v603 = vpack.c.bf16 %v589, %v588
        %v604 = vpack.c.bf16 %v591, %v590
        %v605 = vpack.c.bf16 %v593, %v592
        %v606 = vpack.c.bf16 %v595, %v594
        %v607 = vpack.c.bf16 %v597, %v596
        %v608 = vpack.c.bf16 %v599, %v598
        %v609 = vpack.c.bf16 %v600, %v600
        %v610 = vld [vmem:[#allocation2 + $0x2] sm:$0xff]
        %v611 = vld [vmem:[#allocation2 + $0xa] sm:$0xff]
        %v612 = vld [vmem:[#allocation2 + $0x12] sm:$0xff]
        %v613 = vld [vmem:[#allocation2 + $0x1a] sm:$0xff]
        %v614 = vld [vmem:[#allocation2 + $0x22] sm:$0xff]
        %v615 = vld [vmem:[#allocation2 + $0x2a] sm:$0xff]
        %v616 = vld [vmem:[#allocation2 + $0x32] sm:$0xff]
        %v617 = vld [vmem:[#allocation2 + $0x3a] sm:$0xff]
        %v618 = vld [vmem:[#allocation2 + $0x42] sm:$0xff]
        %v619 = vld [vmem:[#allocation2 + $0x4a] sm:$0xff]
        %v620 = vld [vmem:[#allocation2 + $0x52] sm:$0xff]
        %v621 = vld [vmem:[#allocation2 + $0x5a] sm:$0xff]
        %v622 = vld [vmem:[#allocation2 + $0x62] sm:$0xff]
        %v623 = vld [vmem:[#allocation2 + $0x6a] sm:$0xff]
        %v624 = vld [vmem:[#allocation2 + $0x72] sm:$0xff]
        %v625 = vld [vmem:[#allocation2 + $0x7a] sm:$0xff]
        %v626 = vld [vmem:[#allocation2 + $0x82] sm:$0x3]
        %v627 = vpack.c.bf16 %v611, %v610
        %v628 = vpack.c.bf16 %v613, %v612
        %v629 = vpack.c.bf16 %v615, %v614
        %v630 = vpack.c.bf16 %v617, %v616
        %v631 = vpack.c.bf16 %v619, %v618
        %v632 = vpack.c.bf16 %v621, %v620
        %v633 = vpack.c.bf16 %v623, %v622
        %v634 = vpack.c.bf16 %v625, %v624
        %v635 = vpack.c.bf16 %v626, %v626
        %v636 = vld [vmem:[#allocation10] sm:$0xf]
        %v637 = vld [vmem:[#allocation10 + $0x4] sm:$0xf]
        %v638 = vld [vmem:[#allocation10 + $0x8] sm:$0xf]
        %v639 = vld [vmem:[#allocation10 + $0xc] sm:$0xf]
        %v640 = vld [vmem:[#allocation10 + $0x10] sm:$0xf]
        %v641 = vld [vmem:[#allocation10 + $0x14] sm:$0xf]
        %v642 = vld [vmem:[#allocation10 + $0x18] sm:$0xf]
        %v643 = vld [vmem:[#allocation10 + $0x1c] sm:$0xf]
        %v644 = vld [vmem:[#allocation10 + $0x20] sm:$0xf]
        %v645 = vld [vmem:[#allocation10 + $0x24] sm:$0xf]
        %v646 = vld [vmem:[#allocation10 + $0x28] sm:$0xf]
        %v647 = vld [vmem:[#allocation10 + $0x2c] sm:$0xf]
        %v648 = vld [vmem:[#allocation10 + $0x30] sm:$0xf]
        %v649 = vld [vmem:[#allocation10 + $0x34] sm:$0xf]
        %v650 = vld [vmem:[#allocation10 + $0x38] sm:$0xf]
        %v651 = vld [vmem:[#allocation10 + $0x3c] sm:$0xf]
        %v652 = vld [vmem:[#allocation10 + $0x40] sm:$0xf]
        %v653 = vld [vmem:[#allocation10 + $0x44] sm:$0xf]
        %v654 = vld [vmem:[#allocation10 + $0x48] sm:$0xf]
        %v655 = vld [vmem:[#allocation10 + $0x4c] sm:$0xf]
        %v656 = vld [vmem:[#allocation10 + $0x50] sm:$0xf]
        %v657 = vld [vmem:[#allocation10 + $0x54] sm:$0xf]
        %v658 = vld [vmem:[#allocation10 + $0x58] sm:$0xf]
        %v659 = vld [vmem:[#allocation10 + $0x5c] sm:$0xf]
        %v660 = vld [vmem:[#allocation10 + $0x60] sm:$0xf]
        %v661 = vld [vmem:[#allocation10 + $0x64] sm:$0xf]
        %v662 = vld [vmem:[#allocation10 + $0x68] sm:$0xf]
        %v663 = vld [vmem:[#allocation10 + $0x6c] sm:$0xf]
        %v664 = vld [vmem:[#allocation10 + $0x70] sm:$0xf]
        %v665 = vld [vmem:[#allocation10 + $0x74] sm:$0xf]
        %v666 = vld [vmem:[#allocation10 + $0x78] sm:$0xf]
        %v667 = vld [vmem:[#allocation10 + $0x7c] sm:$0xf]
        %v668 = vld [vmem:[#allocation10 + $0x80] sm:$0xf]
        %v669 = vld [vmem:[#allocation10 + $0x84] sm:$0xf]
        %v670 = vld [vmem:[#allocation10 + $0x88] sm:$0xf]
        %v671 = vld [vmem:[#allocation10 + $0x8c] sm:$0xf]
        %v672 = vld [vmem:[#allocation10 + $0x90] sm:$0xf]
        %v673 = vld [vmem:[#allocation10 + $0x94] sm:$0xf]
        %v674 = vld [vmem:[#allocation10 + $0x98] sm:$0xf]
        %v675 = vld [vmem:[#allocation10 + $0x9c] sm:$0xf]
        %v676 = vld [vmem:[#allocation10 + $0xa0] sm:$0xf]
        %v677 = vld [vmem:[#allocation10 + $0xa4] sm:$0xf]
        %v678 = vld [vmem:[#allocation10 + $0xa8] sm:$0xf]
        %v679 = vld [vmem:[#allocation10 + $0xac] sm:$0xf]
        %v680 = vld [vmem:[#allocation10 + $0xb0] sm:$0xf]
        %v681 = vld [vmem:[#allocation10 + $0xb4] sm:$0xf]
        %v682 = vld [vmem:[#allocation10 + $0xb8] sm:$0xf]
        %v683 = vld [vmem:[#allocation10 + $0xbc] sm:$0xf]
        %v684 = vld [vmem:[%s4] sm:$0x1]
        %v686 = vlaneseq
        %v687 = vshrl.u32 %v686, 7
        %v688 = vsub.s32 0, %v687
        %v689 = vrot.slane %v684, %v688
        %v739 = vunpack.c.l.b16 %v636
        %v740 = vunpack.c.l.b16 %v637
        %v741 = vunpack.c.l.b16 %v638
        %v742 = vunpack.c.l.b16 %v639
        %v743 = vunpack.c.l.b16 %v640
        %v744 = vunpack.c.l.b16 %v641
        %v745 = vunpack.c.l.b16 %v642
        %v746 = vunpack.c.l.b16 %v643
        %v747 = vunpack.c.l.b16 %v644
        %v748 = vunpack.c.l.b16 %v645
        %v749 = vunpack.c.l.b16 %v646
        %v750 = vunpack.c.l.b16 %v647
        %v751 = vunpack.c.l.b16 %v648
        %v752 = vunpack.c.l.b16 %v649
        %v753 = vunpack.c.l.b16 %v650
        %v754 = vunpack.c.l.b16 %v651
        %v755 = vunpack.c.l.b16 %v652
        %v756 = vunpack.c.l.b16 %v653
        %v757 = vunpack.c.l.b16 %v654
        %v758 = vunpack.c.l.b16 %v655
        %v759 = vunpack.c.l.b16 %v656
        %v760 = vunpack.c.l.b16 %v657
        %v761 = vunpack.c.l.b16 %v658
        %v762 = vunpack.c.l.b16 %v659
        %v763 = vunpack.c.l.b16 %v660
        %v764 = vunpack.c.l.b16 %v661
        %v765 = vunpack.c.l.b16 %v662
        %v766 = vunpack.c.l.b16 %v663
        %v767 = vunpack.c.l.b16 %v664
        %v768 = vunpack.c.l.b16 %v665
        %v769 = vunpack.c.l.b16 %v666
        %v770 = vunpack.c.l.b16 %v667
        %v771 = vunpack.c.l.b16 %v668
        %v772 = vunpack.c.l.b16 %v669
        %v773 = vunpack.c.l.b16 %v670
        %v774 = vunpack.c.l.b16 %v671
        %v775 = vunpack.c.l.b16 %v672
        %v776 = vunpack.c.l.b16 %v673
        %v777 = vunpack.c.l.b16 %v674
        %v778 = vunpack.c.l.b16 %v675
        %v779 = vunpack.c.l.b16 %v676
        %v780 = vunpack.c.l.b16 %v677
        %v781 = vunpack.c.l.b16 %v678
        %v782 = vunpack.c.l.b16 %v679
        %v783 = vunpack.c.l.b16 %v680
        %v784 = vunpack.c.l.b16 %v681
        %v785 = vunpack.c.l.b16 %v682
        %v786 = vunpack.c.l.b16 %v683
        %v787 = vpack.c.b16 %v740, %v739
        %v788 = vpack.c.b16 %v742, %v741
        %v789 = vpack.c.b16 %v744, %v743
        %v790 = vpack.c.b16 %v746, %v745
        %v791 = vpack.c.b16 %v748, %v747
        %v792 = vpack.c.b16 %v750, %v749
        %v793 = vpack.c.b16 %v752, %v751
        %v794 = vpack.c.b16 %v754, %v753
        %v795 = vpack.c.b16 %v756, %v755
        %v796 = vpack.c.b16 %v758, %v757
        %v797 = vpack.c.b16 %v760, %v759
        %v798 = vpack.c.b16 %v762, %v761
        %v799 = vpack.c.b16 %v764, %v763
        %v800 = vpack.c.b16 %v766, %v765
        %v801 = vpack.c.b16 %v768, %v767
        %v802 = vpack.c.b16 %v770, %v769
        %v803 = vpack.c.b16 %v772, %v771
        %v804 = vpack.c.b16 %v774, %v773
        %v805 = vpack.c.b16 %v776, %v775
        %v806 = vpack.c.b16 %v778, %v777
        %v807 = vpack.c.b16 %v780, %v779
        %v808 = vpack.c.b16 %v782, %v781
        %v809 = vpack.c.b16 %v784, %v783
        %v810 = vpack.c.b16 %v786, %v785
        %835 = vmatprep.subr.bf16.mxu0 0
        %836 = vmatpush1.bf16.msra.mxu0 %v794
        %837 = vmatprep.subr.bf16.mxu0 0
        %838 = vmatpush1.bf16.msra.mxu0 %v793
        %839 = vmatprep.subr.bf16.mxu0 0
        %840 = vmatpush1.bf16.msra.mxu0 %v792
        %841 = vmatprep.subr.bf16.mxu0 0
        %842 = vmatpush1.bf16.msra.mxu0 %v791
        %843 = vmatprep.subr.bf16.mxu0 0
        %844 = vmatpush1.bf16.msra.mxu0 %v790
        %845 = vmatprep.subr.bf16.mxu0 0
        %846 = vmatpush1.bf16.msra.mxu0 %v789
        %847 = vmatprep.subr.bf16.mxu0 0
        %848 = vmatpush1.bf16.msra.mxu0 %v788
        %849 = vmatprep.subr.bf16.mxu0 0
        %850 = vmatpush1.bf16.msra.mxu0 %v787
        %851 = vmatprep.subr.bf16.mxu0 0
        %852 = vmatpush2.bf16.msra.mxu0 %v802
        %853 = vmatprep.subr.bf16.mxu0 0
        %854 = vmatpush2.bf16.msra.mxu0 %v801
        %855 = vmatprep.subr.bf16.mxu0 0
        %856 = vmatpush2.bf16.msra.mxu0 %v800
        %857 = vmatprep.subr.bf16.mxu0 0
        %858 = vmatpush2.bf16.msra.mxu0 %v799
        %859 = vmatprep.subr.bf16.mxu0 0
        %860 = vmatpush2.bf16.msra.mxu0 %v798
        %861 = vmatprep.subr.bf16.mxu0 0
        %862 = vmatpush2.bf16.msra.mxu0 %v797
        %863 = vmatprep.subr.bf16.mxu0 0
        %864 = vmatpush2.bf16.msra.mxu0 %v796
        %865 = vmatprep.subr.bf16.mxu0 0
        %866 = vmatpush2.bf16.msra.mxu0 %v795
        %867 = vmatprep.mubr.bf16.mxu0 %v601
        %868 = vmatmul.mubr.bf16.gmra.mxu0 %v575
        %v869 = vpop.f32.mrf.mxu0
        %v870 = vadd.f32 %v689, %v869
        %v871 = vpop.f32.mrf.mxu0
        %v872 = vpop.f32.mrf.mxu0
        %v873 = vadd.f32 %v689, %v872
        %v874 = vpop.f32.mrf.mxu0
        %875 = vmatprep.mubr.bf16.mxu0 %v602
        %876 = vmatmul.mubr.bf16.gmra.mxu0 %v576
        %v877 = vpop.f32.mrf.mxu0
        %v878 = vadd.f32 %v689, %v877
        %v879 = vpop.f32.mrf.mxu0
        %v880 = vpop.f32.mrf.mxu0
        %v881 = vadd.f32 %v689, %v880
        %v882 = vpop.f32.mrf.mxu0
        %883 = vmatprep.mubr.bf16.mxu0 %v603
        %884 = vmatmul.mubr.bf16.gmra.mxu0 %v577
        %v885 = vpop.f32.mrf.mxu0
        %v886 = vadd.f32 %v689, %v885
        %v887 = vpop.f32.mrf.mxu0
        %v888 = vpop.f32.mrf.mxu0
        %v889 = vadd.f32 %v689, %v888
        %v890 = vpop.f32.mrf.mxu0
        %891 = vmatprep.mubr.bf16.mxu0 %v604
        %892 = vmatmul.mubr.bf16.gmra.mxu0 %v578
        %v893 = vpop.f32.mrf.mxu0
        %v894 = vadd.f32 %v689, %v893
        %v895 = vpop.f32.mrf.mxu0
        %v896 = vpop.f32.mrf.mxu0
        %v897 = vadd.f32 %v689, %v896
        %v898 = vpop.f32.mrf.mxu0
        %899 = vmatprep.mubr.bf16.mxu0 %v605
        %900 = vmatmul.mubr.bf16.gmra.mxu0 %v579
        %v901 = vpop.f32.mrf.mxu0
        %v902 = vadd.f32 %v689, %v901
        %v903 = vpop.f32.mrf.mxu0
        %v904 = vpop.f32.mrf.mxu0
        %v905 = vadd.f32 %v689, %v904
        %v906 = vpop.f32.mrf.mxu0
        %907 = vmatprep.mubr.bf16.mxu0 %v606
        %908 = vmatmul.mubr.bf16.gmra.mxu0 %v580
        %v909 = vpop.f32.mrf.mxu0
        %v910 = vadd.f32 %v689, %v909
        %v911 = vpop.f32.mrf.mxu0
        %v912 = vpop.f32.mrf.mxu0
        %v913 = vadd.f32 %v689, %v912
        %v914 = vpop.f32.mrf.mxu0
        %915 = vmatprep.mubr.bf16.mxu0 %v607
        %916 = vmatmul.mubr.bf16.gmra.mxu0 %v581
        %v917 = vpop.f32.mrf.mxu0
        %v918 = vadd.f32 %v689, %v917
        %v919 = vpop.f32.mrf.mxu0
        %v920 = vpop.f32.mrf.mxu0
        %v921 = vadd.f32 %v689, %v920
        %v922 = vpop.f32.mrf.mxu0
        %923 = vmatprep.mubr.bf16.mxu0 %v608
        %924 = vmatmul.mubr.bf16.gmra.mxu0 %v582
        %v925 = vpop.f32.mrf.mxu0
        %v926 = vadd.f32 %v689, %v925
        %v927 = vpop.f32.mrf.mxu0
        %v928 = vpop.f32.mrf.mxu0
        %v929 = vadd.f32 %v689, %v928
        %v930 = vpop.f32.mrf.mxu0
        %931 = vmatprep.mubr.bf16.mxu0 %v609
        %932 = vmatmul.mubr.bf16.gmra.mxu0 %v583
        %v933 = vpop.f32.mrf.mxu0
        %v934 = vadd.f32 %v689, %v933
        %v935 = vpop.f32.mrf.mxu0
        %v936 = vpop.f32.mrf.mxu0
        %v937 = vpop.f32.mrf.mxu0
        %938 = vdwg.mxu0
        %939 = vmatprep.subr.bf16.mxu0 0
        %940 = vmatpush1.bf16.msra.mxu0 %v810
        %941 = vmatprep.subr.bf16.mxu0 0
        %942 = vmatpush1.bf16.msra.mxu0 %v809
        %943 = vmatprep.subr.bf16.mxu0 0
        %944 = vmatpush1.bf16.msra.mxu0 %v808
        %945 = vmatprep.subr.bf16.mxu0 0
        %946 = vmatpush1.bf16.msra.mxu0 %v807
        %947 = vmatprep.subr.bf16.mxu0 0
        %948 = vmatpush1.bf16.msra.mxu0 %v806
        %949 = vmatprep.subr.bf16.mxu0 0
        %950 = vmatpush1.bf16.msra.mxu0 %v805
        %951 = vmatprep.subr.bf16.mxu0 0
        %952 = vmatpush1.bf16.msra.mxu0 %v804
        %953 = vmatprep.subr.bf16.mxu0 0
        %954 = vmatpush1.bf16.msra.mxu0 %v803
        %955 = vmatprep.subr.bf16.mxu0 0
        %956 = vmatpush2.bf16.msra.mxu0 0
        %957 = vmatprep.subr.bf16.mxu0 0
        %958 = vmatpush2.bf16.msra.mxu0 0
        %959 = vmatprep.subr.bf16.mxu0 0
        %960 = vmatpush2.bf16.msra.mxu0 0
        %961 = vmatprep.subr.bf16.mxu0 0
        %962 = vmatpush2.bf16.msra.mxu0 0
        %963 = vmatprep.subr.bf16.mxu0 0
        %964 = vmatpush2.bf16.msra.mxu0 0
        %965 = vmatprep.subr.bf16.mxu0 0
        %966 = vmatpush2.bf16.msra.mxu0 0
        %967 = vmatprep.subr.bf16.mxu0 0
        %968 = vmatpush2.bf16.msra.mxu0 0
        %969 = vmatprep.subr.bf16.mxu0 0
        %970 = vmatpush2.bf16.msra.mxu0 0
        %971 = vmatprep.mubr.bf16.mxu0 0
        %972 = vmatmul.mubr.bf16.gmra.mxu0 %v627
        %v973 = vpop.f32.mrf.mxu0
        %v974 = vadd.f32 %v870, %v973
        %v975 = vpop.f32.mrf.mxu0
        %v976 = vpop.f32.mrf.mxu0
        %v977 = vadd.f32 %v873, %v976
        %v978 = vpop.f32.mrf.mxu0
        %979 = vmatprep.mubr.bf16.mxu0 0
        %980 = vmatmul.mubr.bf16.gmra.mxu0 %v628
        %v981 = vpop.f32.mrf.mxu0
        %v982 = vadd.f32 %v878, %v981
        %v983 = vpop.f32.mrf.mxu0
        %v984 = vpop.f32.mrf.mxu0
        %v985 = vadd.f32 %v881, %v984
        %v986 = vpop.f32.mrf.mxu0
        %987 = vmatprep.mubr.bf16.mxu0 0
        %988 = vmatmul.mubr.bf16.gmra.mxu0 %v629
        %v989 = vpop.f32.mrf.mxu0
        %v990 = vadd.f32 %v886, %v989
        %v991 = vpop.f32.mrf.mxu0
        %v992 = vpop.f32.mrf.mxu0
        %v993 = vadd.f32 %v889, %v992
        %v994 = vpop.f32.mrf.mxu0
        %995 = vmatprep.mubr.bf16.mxu0 0
        %996 = vmatmul.mubr.bf16.gmra.mxu0 %v630
        %v997 = vpop.f32.mrf.mxu0
        %v998 = vadd.f32 %v894, %v997
        %v999 = vpop.f32.mrf.mxu0
        %v1000 = vpop.f32.mrf.mxu0
        %v1001 = vadd.f32 %v897, %v1000
        %v1002 = vpop.f32.mrf.mxu0
        %1003 = vmatprep.mubr.bf16.mxu0 0
        %1004 = vmatmul.mubr.bf16.gmra.mxu0 %v631
        %v1005 = vpop.f32.mrf.mxu0
        %v1006 = vadd.f32 %v902, %v1005
        %v1007 = vpop.f32.mrf.mxu0
        %v1008 = vpop.f32.mrf.mxu0
        %v1009 = vadd.f32 %v905, %v1008
        %v1010 = vpop.f32.mrf.mxu0
        %1011 = vmatprep.mubr.bf16.mxu0 0
        %1012 = vmatmul.mubr.bf16.gmra.mxu0 %v632
        %v1013 = vpop.f32.mrf.mxu0
        %v1014 = vadd.f32 %v910, %v1013
        %v1015 = vpop.f32.mrf.mxu0
        %v1016 = vpop.f32.mrf.mxu0
        %v1017 = vadd.f32 %v913, %v1016
        %v1018 = vpop.f32.mrf.mxu0
        %1019 = vmatprep.mubr.bf16.mxu0 0
        %1020 = vmatmul.mubr.bf16.gmra.mxu0 %v633
        %v1021 = vpop.f32.mrf.mxu0
        %v1022 = vadd.f32 %v918, %v1021
        %v1023 = vpop.f32.mrf.mxu0
        %v1024 = vpop.f32.mrf.mxu0
        %v1025 = vadd.f32 %v921, %v1024
        %v1026 = vpop.f32.mrf.mxu0
        %1027 = vmatprep.mubr.bf16.mxu0 0
        %1028 = vmatmul.mubr.bf16.gmra.mxu0 %v634
        %v1029 = vpop.f32.mrf.mxu0
        %v1030 = vadd.f32 %v926, %v1029
        %v1031 = vpop.f32.mrf.mxu0
        %v1032 = vpop.f32.mrf.mxu0
        %v1033 = vadd.f32 %v929, %v1032
        %v1034 = vpop.f32.mrf.mxu0
        %1035 = vmatprep.mubr.bf16.mxu0 0
        %1036 = vmatmul.mubr.bf16.gmra.mxu0 %v635
        %v1037 = vpop.f32.mrf.mxu0
        %v1038 = vadd.f32 %v934, %v1037
        %v1039 = vpop.f32.mrf.mxu0
        %v1040 = vpop.f32.mrf.mxu0
        %v1041 = vpop.f32.mrf.mxu0
        %1042 = vdwg.mxu0
        %v1043 = vlaneseq
        %v1044 = vshrl.u32 %v1043, 7
        %v1045 = vadd.s32 %v1044, 8
        %v1046 = vadd.s32 %v1044, 16
        %v1047 = vadd.s32 %v1044, 24
        %v1048 = vadd.s32 %v1044, 32
        %v1049 = vadd.s32 %v1044, 40
        %v1050 = vadd.s32 %v1044, 48
        %v1051 = vadd.s32 %v1044, 56
        %v1052 = vadd.s32 %v1044, 64
        %v1053 = vadd.s32 %v1044, 72
        %v1054 = vadd.s32 %v1044, 80
        %v1055 = vadd.s32 %v1044, 88
        %v1056 = vadd.s32 %v1044, 96
        %v1057 = vadd.s32 %v1044, 104
        %v1058 = vadd.s32 %v1044, 112
        %v1059 = vadd.s32 %v1044, 120
        %v1060 = vadd.s32 %v1044, 128
        %s1061 = smul.u32 %s33, 128
        %s1062 = ssub.s32 %s1061, 1
        %v1063 = vstv %s1062
        %v1064 = vadd.s32 %v1063, %v1044
        %v1065 = vadd.s32 %v1063, %v1045
        %v1066 = vadd.s32 %v1063, %v1046
        %v1067 = vadd.s32 %v1063, %v1047
        %v1068 = vadd.s32 %v1063, %v1048
        %v1069 = vadd.s32 %v1063, %v1049
        %v1070 = vadd.s32 %v1063, %v1050
        %v1071 = vadd.s32 %v1063, %v1051
        %v1072 = vadd.s32 %v1063, %v1052
        %v1073 = vadd.s32 %v1063, %v1053
        %v1074 = vadd.s32 %v1063, %v1054
        %v1075 = vadd.s32 %v1063, %v1055
        %v1076 = vadd.s32 %v1063, %v1056
        %v1077 = vadd.s32 %v1063, %v1057
        %v1078 = vadd.s32 %v1063, %v1058
        %v1079 = vadd.s32 %v1063, %v1059
        %v1080 = vadd.s32 %v1063, %v1060
        %vm1081 = vcmp.ge.s32.totalorder %v1064, 0
        %vm1082 = vcmp.ge.s32.totalorder %v1065, 0
        %vm1083 = vcmp.ge.s32.totalorder %v1066, 0
        %vm1084 = vcmp.ge.s32.totalorder %v1067, 0
        %vm1085 = vcmp.ge.s32.totalorder %v1068, 0
        %vm1086 = vcmp.ge.s32.totalorder %v1069, 0
        %vm1087 = vcmp.ge.s32.totalorder %v1070, 0
        %vm1088 = vcmp.ge.s32.totalorder %v1071, 0
        %vm1089 = vcmp.ge.s32.totalorder %v1072, 0
        %vm1090 = vcmp.ge.s32.totalorder %v1073, 0
        %vm1091 = vcmp.ge.s32.totalorder %v1074, 0
        %vm1092 = vcmp.ge.s32.totalorder %v1075, 0
        %vm1093 = vcmp.ge.s32.totalorder %v1076, 0
        %vm1094 = vcmp.ge.s32.totalorder %v1077, 0
        %vm1095 = vcmp.ge.s32.totalorder %v1078, 0
        %vm1096 = vcmp.ge.s32.totalorder %v1079, 0
        %vm1097 = vcmp.ge.s32.totalorder %v1080, 0
        %vm1098 = vcmp.lt.s32.totalorder %v1064, 512
        %vm1099 = vcmp.lt.s32.totalorder %v1065, 512
        %vm1100 = vcmp.lt.s32.totalorder %v1066, 512
        %vm1101 = vcmp.lt.s32.totalorder %v1067, 512
        %vm1102 = vcmp.lt.s32.totalorder %v1068, 512
        %vm1103 = vcmp.lt.s32.totalorder %v1069, 512
        %vm1104 = vcmp.lt.s32.totalorder %v1070, 512
        %vm1105 = vcmp.lt.s32.totalorder %v1071, 512
        %vm1106 = vcmp.lt.s32.totalorder %v1072, 512
        %vm1107 = vcmp.lt.s32.totalorder %v1073, 512
        %vm1108 = vcmp.lt.s32.totalorder %v1074, 512
        %vm1109 = vcmp.lt.s32.totalorder %v1075, 512
        %vm1110 = vcmp.lt.s32.totalorder %v1076, 512
        %vm1111 = vcmp.lt.s32.totalorder %v1077, 512
        %vm1112 = vcmp.lt.s32.totalorder %v1078, 512
        %vm1113 = vcmp.lt.s32.totalorder %v1079, 512
        %vm1114 = vcmp.lt.s32.totalorder %v1080, 512
        %vm1115 = vmand %vm1081, %vm1098
        %vm1116 = vmand %vm1082, %vm1099
        %vm1117 = vmand %vm1083, %vm1100
        %vm1118 = vmand %vm1084, %vm1101
        %vm1119 = vmand %vm1085, %vm1102
        %vm1120 = vmand %vm1086, %vm1103
        %vm1121 = vmand %vm1087, %vm1104
        %vm1122 = vmand %vm1088, %vm1105
        %vm1123 = vmand %vm1089, %vm1106
        %vm1124 = vmand %vm1090, %vm1107
        %vm1125 = vmand %vm1091, %vm1108
        %vm1126 = vmand %vm1092, %vm1109
        %vm1127 = vmand %vm1093, %vm1110
        %vm1128 = vmand %vm1094, %vm1111
        %vm1129 = vmand %vm1095, %vm1112
        %vm1130 = vmand %vm1096, %vm1113
        %vm1131 = vmand %vm1097, %vm1114
        %v1132 = vsel %vm1115, 1, 0
        %v1133 = vsel %vm1116, 1, 0
        %v1134 = vsel %vm1117, 1, 0
        %v1135 = vsel %vm1118, 1, 0
        %v1136 = vsel %vm1119, 1, 0
        %v1137 = vsel %vm1120, 1, 0
        %v1138 = vsel %vm1121, 1, 0
        %v1139 = vsel %vm1122, 1, 0
        %v1140 = vsel %vm1123, 1, 0
        %v1141 = vsel %vm1124, 1, 0
        %v1142 = vsel %vm1125, 1, 0
        %v1143 = vsel %vm1126, 1, 0
        %v1144 = vsel %vm1127, 1, 0
        %v1145 = vsel %vm1128, 1, 0
        %v1146 = vsel %vm1129, 1, 0
        %v1147 = vsel %vm1130, 1, 0
        %v1148 = vsel %vm1131, 1, 0
        %vm1149 = vcmp.eq.s32.totalorder %v1132, 1
        %vm1150 = vcmp.eq.s32.totalorder %v1133, 1
        %vm1151 = vcmp.eq.s32.totalorder %v1134, 1
        %vm1152 = vcmp.eq.s32.totalorder %v1135, 1
        %vm1153 = vcmp.eq.s32.totalorder %v1136, 1
        %vm1154 = vcmp.eq.s32.totalorder %v1137, 1
        %vm1155 = vcmp.eq.s32.totalorder %v1138, 1
        %vm1156 = vcmp.eq.s32.totalorder %v1139, 1
        %vm1157 = vcmp.eq.s32.totalorder %v1140, 1
        %vm1158 = vcmp.eq.s32.totalorder %v1141, 1
        %vm1159 = vcmp.eq.s32.totalorder %v1142, 1
        %vm1160 = vcmp.eq.s32.totalorder %v1143, 1
        %vm1161 = vcmp.eq.s32.totalorder %v1144, 1
        %vm1162 = vcmp.eq.s32.totalorder %v1145, 1
        %vm1163 = vcmp.eq.s32.totalorder %v1146, 1
        %vm1164 = vcmp.eq.s32.totalorder %v1147, 1
        %vm1165 = vcmp.eq.s32.totalorder %v1148, 1
        %v1166 = vsel %vm1149, %v974, 0.0
        %v1167 = vsel %vm1150, %v977, 0.0
        %v1168 = vsel %vm1151, %v982, 0.0
        %v1169 = vsel %vm1152, %v985, 0.0
        %v1170 = vsel %vm1153, %v990, 0.0
        %v1171 = vsel %vm1154, %v993, 0.0
        %v1172 = vsel %vm1155, %v998, 0.0
        %v1173 = vsel %vm1156, %v1001, 0.0
        %v1174 = vsel %vm1157, %v1006, 0.0
        %v1175 = vsel %vm1158, %v1009, 0.0
        %v1176 = vsel %vm1159, %v1014, 0.0
        %v1177 = vsel %vm1160, %v1017, 0.0
        %v1178 = vsel %vm1161, %v1022, 0.0
        %v1179 = vsel %vm1162, %v1025, 0.0
        %v1180 = vsel %vm1163, %v1030, 0.0
        %v1181 = vsel %vm1164, %v1033, 0.0
        %v1182 = vsel %vm1165, %v1038, 0.0
        %vm1183 = vcmp.gt.f32.partialorder %v1166, 0.0
        %vm1184 = vcmp.gt.f32.partialorder %v1167, 0.0
        %vm1185 = vcmp.gt.f32.partialorder %v1168, 0.0
        %vm1186 = vcmp.gt.f32.partialorder %v1169, 0.0
        %vm1187 = vcmp.gt.f32.partialorder %v1170, 0.0
        %vm1188 = vcmp.gt.f32.partialorder %v1171, 0.0
        %vm1189 = vcmp.gt.f32.partialorder %v1172, 0.0
        %vm1190 = vcmp.gt.f32.partialorder %v1173, 0.0
        %vm1191 = vcmp.gt.f32.partialorder %v1174, 0.0
        %vm1192 = vcmp.gt.f32.partialorder %v1175, 0.0
        %vm1193 = vcmp.gt.f32.partialorder %v1176, 0.0
        %vm1194 = vcmp.gt.f32.partialorder %v1177, 0.0
        %vm1195 = vcmp.gt.f32.partialorder %v1178, 0.0
        %vm1196 = vcmp.gt.f32.partialorder %v1179, 0.0
        %vm1197 = vcmp.gt.f32.partialorder %v1180, 0.0
        %vm1198 = vcmp.gt.f32.partialorder %v1181, 0.0
        %vm1199 = vcmp.gt.f32.partialorder %v1182, 0.0
        %v1200 = vmul.f32 %v1166, 0.1
        %v1201 = vmul.f32 %v1167, 0.1
        %v1202 = vmul.f32 %v1168, 0.1
        %v1203 = vmul.f32 %v1169, 0.1
        %v1204 = vmul.f32 %v1170, 0.1
        %v1205 = vmul.f32 %v1171, 0.1
        %v1206 = vmul.f32 %v1172, 0.1
        %v1207 = vmul.f32 %v1173, 0.1
        %v1208 = vmul.f32 %v1174, 0.1
        %v1209 = vmul.f32 %v1175, 0.1
        %v1210 = vmul.f32 %v1176, 0.1
        %v1211 = vmul.f32 %v1177, 0.1
        %v1212 = vmul.f32 %v1178, 0.1
        %v1213 = vmul.f32 %v1179, 0.1
        %v1214 = vmul.f32 %v1180, 0.1
        %v1215 = vmul.f32 %v1181, 0.1
        %v1216 = vmul.f32 %v1182, 0.1
        %v1217 = vsel %vm1183, %v1166, %v1200
        %v1218 = vsel %vm1184, %v1167, %v1201
        %v1219 = vsel %vm1185, %v1168, %v1202
        %v1220 = vsel %vm1186, %v1169, %v1203
        %v1221 = vsel %vm1187, %v1170, %v1204
        %v1222 = vsel %vm1188, %v1171, %v1205
        %v1223 = vsel %vm1189, %v1172, %v1206
        %v1224 = vsel %vm1190, %v1173, %v1207
        %v1225 = vsel %vm1191, %v1174, %v1208
        %v1226 = vsel %vm1192, %v1175, %v1209
        %v1227 = vsel %vm1193, %v1176, %v1210
        %v1228 = vsel %vm1194, %v1177, %v1211
        %v1229 = vsel %vm1195, %v1178, %v1212
        %v1230 = vsel %vm1196, %v1179, %v1213
        %v1231 = vsel %vm1197, %v1180, %v1214
        %v1232 = vsel %vm1198, %v1181, %v1215
        %v1233 = vsel %vm1199, %v1182, %v1216
        %1234 = vst [vmem:[#allocation3] sm:$0xff] %v1217
        %1235 = vst [vmem:[#allocation3 + $0x8] sm:$0xff] %v1218
        %1236 = vst [vmem:[#allocation3 + $0x10] sm:$0xff] %v1219
        %1237 = vst [vmem:[#allocation3 + $0x18] sm:$0xff] %v1220
        %1238 = vst [vmem:[#allocation3 + $0x20] sm:$0xff] %v1221
        %1239 = vst [vmem:[#allocation3 + $0x28] sm:$0xff] %v1222
        %1240 = vst [vmem:[#allocation3 + $0x30] sm:$0xff] %v1223
        %1241 = vst [vmem:[#allocation3 + $0x38] sm:$0xff] %v1224
        %1242 = vst [vmem:[#allocation3 + $0x40] sm:$0xff] %v1225
        %1243 = vst [vmem:[#allocation3 + $0x48] sm:$0xff] %v1226
        %1244 = vst [vmem:[#allocation3 + $0x50] sm:$0xff] %v1227
        %1245 = vst [vmem:[#allocation3 + $0x58] sm:$0xff] %v1228
        %1246 = vst [vmem:[#allocation3 + $0x60] sm:$0xff] %v1229
        %1247 = vst [vmem:[#allocation3 + $0x68] sm:$0xff] %v1230
        %1248 = vst [vmem:[#allocation3 + $0x70] sm:$0xff] %v1231
        %1249 = vst [vmem:[#allocation3 + $0x78] sm:$0xff] %v1232
        %1250 = vst [vmem:[#allocation3 + $0x80] sm:$0x3] %v1233
        %v1251 = vld [vmem:[#allocation3] sm:$0xff]
        %v1252 = vld [vmem:[#allocation3 + $0x8] sm:$0xff]
        %v1253 = vld [vmem:[#allocation3 + $0x10] sm:$0xff]
        %v1254 = vld [vmem:[#allocation3 + $0x18] sm:$0xff]
        %v1255 = vld [vmem:[#allocation3 + $0x20] sm:$0xff]
        %v1256 = vld [vmem:[#allocation3 + $0x28] sm:$0xff]
        %v1257 = vld [vmem:[#allocation3 + $0x30] sm:$0xff]
        %v1258 = vld [vmem:[#allocation3 + $0x38] sm:$0xff]
        %v1259 = vld [vmem:[#allocation3 + $0x40] sm:$0xff]
        %v1260 = vld [vmem:[#allocation3 + $0x48] sm:$0xff]
        %v1261 = vld [vmem:[#allocation3 + $0x50] sm:$0xff]
        %v1262 = vld [vmem:[#allocation3 + $0x58] sm:$0xff]
        %v1263 = vld [vmem:[#allocation3 + $0x60] sm:$0xff]
        %v1264 = vld [vmem:[#allocation3 + $0x68] sm:$0xff]
        %v1265 = vld [vmem:[#allocation3 + $0x70] sm:$0xff]
        %v1266 = vld [vmem:[#allocation3 + $0x78] sm:$0xff]
        %v1267 = vpack.c.bf16 %v1252, %v1251
        %v1268 = vpack.c.bf16 %v1254, %v1253
        %v1269 = vpack.c.bf16 %v1256, %v1255
        %v1270 = vpack.c.bf16 %v1258, %v1257
        %v1271 = vpack.c.bf16 %v1260, %v1259
        %v1272 = vpack.c.bf16 %v1262, %v1261
        %v1273 = vpack.c.bf16 %v1264, %v1263
        %v1274 = vpack.c.bf16 %v1266, %v1265
        %v1275 = vld [vmem:[#allocation3 + $0x1] sm:$0xff]
        %v1276 = vld [vmem:[#allocation3 + $0x9] sm:$0xff]
        %v1277 = vld [vmem:[#allocation3 + $0x11] sm:$0xff]
        %v1278 = vld [vmem:[#allocation3 + $0x19] sm:$0xff]
        %v1279 = vld [vmem:[#allocation3 + $0x21] sm:$0xff]
        %v1280 = vld [vmem:[#allocation3 + $0x29] sm:$0xff]
        %v1281 = vld [vmem:[#allocation3 + $0x31] sm:$0xff]
        %v1282 = vld [vmem:[#allocation3 + $0x39] sm:$0xff]
        %v1283 = vld [vmem:[#allocation3 + $0x41] sm:$0xff]
        %v1284 = vld [vmem:[#allocation3 + $0x49] sm:$0xff]
        %v1285 = vld [vmem:[#allocation3 + $0x51] sm:$0xff]
        %v1286 = vld [vmem:[#allocation3 + $0x59] sm:$0xff]
        %v1287 = vld [vmem:[#allocation3 + $0x61] sm:$0xff]
        %v1288 = vld [vmem:[#allocation3 + $0x69] sm:$0xff]
        %v1289 = vld [vmem:[#allocation3 + $0x71] sm:$0xff]
        %v1290 = vld [vmem:[#allocation3 + $0x79] sm:$0xff]
        %v1291 = vpack.c.bf16 %v1276, %v1275
        %v1292 = vpack.c.bf16 %v1278, %v1277
        %v1293 = vpack.c.bf16 %v1280, %v1279
        %v1294 = vpack.c.bf16 %v1282, %v1281
        %v1295 = vpack.c.bf16 %v1284, %v1283
        %v1296 = vpack.c.bf16 %v1286, %v1285
        %v1297 = vpack.c.bf16 %v1288, %v1287
        %v1298 = vpack.c.bf16 %v1290, %v1289
        %v1299 = vld [vmem:[#allocation3 + $0x2] sm:$0xff]
        %v1300 = vld [vmem:[#allocation3 + $0xa] sm:$0xff]
        %v1301 = vld [vmem:[#allocation3 + $0x12] sm:$0xff]
        %v1302 = vld [vmem:[#allocation3 + $0x1a] sm:$0xff]
        %v1303 = vld [vmem:[#allocation3 + $0x22] sm:$0xff]
        %v1304 = vld [vmem:[#allocation3 + $0x2a] sm:$0xff]
        %v1305 = vld [vmem:[#allocation3 + $0x32] sm:$0xff]
        %v1306 = vld [vmem:[#allocation3 + $0x3a] sm:$0xff]
        %v1307 = vld [vmem:[#allocation3 + $0x42] sm:$0xff]
        %v1308 = vld [vmem:[#allocation3 + $0x4a] sm:$0xff]
        %v1309 = vld [vmem:[#allocation3 + $0x52] sm:$0xff]
        %v1310 = vld [vmem:[#allocation3 + $0x5a] sm:$0xff]
        %v1311 = vld [vmem:[#allocation3 + $0x62] sm:$0xff]
        %v1312 = vld [vmem:[#allocation3 + $0x6a] sm:$0xff]
        %v1313 = vld [vmem:[#allocation3 + $0x72] sm:$0xff]
        %v1314 = vld [vmem:[#allocation3 + $0x7a] sm:$0xff]
        %v1315 = vpack.c.bf16 %v1300, %v1299
        %v1316 = vpack.c.bf16 %v1302, %v1301
        %v1317 = vpack.c.bf16 %v1304, %v1303
        %v1318 = vpack.c.bf16 %v1306, %v1305
        %v1319 = vpack.c.bf16 %v1308, %v1307
        %v1320 = vpack.c.bf16 %v1310, %v1309
        %v1321 = vpack.c.bf16 %v1312, %v1311
        %v1322 = vpack.c.bf16 %v1314, %v1313
        %v1323 = vld [vmem:[#allocation12] sm:$0xf]
        %v1324 = vld [vmem:[#allocation12 + $0x4] sm:$0xf]
        %v1325 = vld [vmem:[#allocation12 + $0x8] sm:$0xf]
        %v1326 = vld [vmem:[#allocation12 + $0xc] sm:$0xf]
        %v1327 = vld [vmem:[#allocation12 + $0x10] sm:$0xf]
        %v1328 = vld [vmem:[#allocation12 + $0x14] sm:$0xf]
        %v1329 = vld [vmem:[#allocation12 + $0x18] sm:$0xf]
        %v1330 = vld [vmem:[#allocation12 + $0x1c] sm:$0xf]
        %v1331 = vld [vmem:[#allocation12 + $0x20] sm:$0xf]
        %v1332 = vld [vmem:[#allocation12 + $0x24] sm:$0xf]
        %v1333 = vld [vmem:[#allocation12 + $0x28] sm:$0xf]
        %v1334 = vld [vmem:[#allocation12 + $0x2c] sm:$0xf]
        %v1335 = vld [vmem:[#allocation12 + $0x30] sm:$0xf]
        %v1336 = vld [vmem:[#allocation12 + $0x34] sm:$0xf]
        %v1337 = vld [vmem:[#allocation12 + $0x38] sm:$0xf]
        %v1338 = vld [vmem:[#allocation12 + $0x3c] sm:$0xf]
        %v1339 = vld [vmem:[#allocation12 + $0x40] sm:$0xf]
        %v1340 = vld [vmem:[#allocation12 + $0x44] sm:$0xf]
        %v1341 = vld [vmem:[#allocation12 + $0x48] sm:$0xf]
        %v1342 = vld [vmem:[#allocation12 + $0x4c] sm:$0xf]
        %v1343 = vld [vmem:[#allocation12 + $0x50] sm:$0xf]
        %v1344 = vld [vmem:[#allocation12 + $0x54] sm:$0xf]
        %v1345 = vld [vmem:[#allocation12 + $0x58] sm:$0xf]
        %v1346 = vld [vmem:[#allocation12 + $0x5c] sm:$0xf]
        %v1347 = vld [vmem:[#allocation12 + $0x60] sm:$0xf]
        %v1348 = vld [vmem:[#allocation12 + $0x64] sm:$0xf]
        %v1349 = vld [vmem:[#allocation12 + $0x68] sm:$0xf]
        %v1350 = vld [vmem:[#allocation12 + $0x6c] sm:$0xf]
        %v1351 = vld [vmem:[#allocation12 + $0x70] sm:$0xf]
        %v1352 = vld [vmem:[#allocation12 + $0x74] sm:$0xf]
        %v1353 = vld [vmem:[#allocation12 + $0x78] sm:$0xf]
        %v1354 = vld [vmem:[#allocation12 + $0x7c] sm:$0xf]
        %v1355 = vld [vmem:[#allocation12 + $0x80] sm:$0xf]
        %v1356 = vld [vmem:[#allocation12 + $0x84] sm:$0xf]
        %v1357 = vld [vmem:[#allocation12 + $0x88] sm:$0xf]
        %v1358 = vld [vmem:[#allocation12 + $0x8c] sm:$0xf]
        %v1359 = vld [vmem:[#allocation12 + $0x90] sm:$0xf]
        %v1360 = vld [vmem:[#allocation12 + $0x94] sm:$0xf]
        %v1361 = vld [vmem:[#allocation12 + $0x98] sm:$0xf]
        %v1362 = vld [vmem:[#allocation12 + $0x9c] sm:$0xf]
        %v1363 = vld [vmem:[#allocation12 + $0xa0] sm:$0xf]
        %v1364 = vld [vmem:[#allocation12 + $0xa4] sm:$0xf]
        %v1365 = vld [vmem:[#allocation12 + $0xa8] sm:$0xf]
        %v1366 = vld [vmem:[#allocation12 + $0xac] sm:$0xf]
        %v1367 = vld [vmem:[#allocation12 + $0xb0] sm:$0xf]
        %v1368 = vld [vmem:[#allocation12 + $0xb4] sm:$0xf]
        %v1369 = vld [vmem:[#allocation12 + $0xb8] sm:$0xf]
        %v1370 = vld [vmem:[#allocation12 + $0xbc] sm:$0xf]
        %v1371 = vld [vmem:[%s6] sm:$0x1]
        %v1373 = vlaneseq
        %v1374 = vshrl.u32 %v1373, 7
        %v1375 = vsub.s32 0, %v1374
        %v1376 = vrot.slane %v1371, %v1375
        %v1426 = vunpack.c.l.b16 %v1323
        %v1427 = vunpack.c.l.b16 %v1324
        %v1428 = vunpack.c.l.b16 %v1325
        %v1429 = vunpack.c.l.b16 %v1326
        %v1430 = vunpack.c.l.b16 %v1327
        %v1431 = vunpack.c.l.b16 %v1328
        %v1432 = vunpack.c.l.b16 %v1329
        %v1433 = vunpack.c.l.b16 %v1330
        %v1434 = vunpack.c.l.b16 %v1331
        %v1435 = vunpack.c.l.b16 %v1332
        %v1436 = vunpack.c.l.b16 %v1333
        %v1437 = vunpack.c.l.b16 %v1334
        %v1438 = vunpack.c.l.b16 %v1335
        %v1439 = vunpack.c.l.b16 %v1336
        %v1440 = vunpack.c.l.b16 %v1337
        %v1441 = vunpack.c.l.b16 %v1338
        %v1442 = vunpack.c.l.b16 %v1339
        %v1443 = vunpack.c.l.b16 %v1340
        %v1444 = vunpack.c.l.b16 %v1341
        %v1445 = vunpack.c.l.b16 %v1342
        %v1446 = vunpack.c.l.b16 %v1343
        %v1447 = vunpack.c.l.b16 %v1344
        %v1448 = vunpack.c.l.b16 %v1345
        %v1449 = vunpack.c.l.b16 %v1346
        %v1450 = vunpack.c.l.b16 %v1347
        %v1451 = vunpack.c.l.b16 %v1348
        %v1452 = vunpack.c.l.b16 %v1349
        %v1453 = vunpack.c.l.b16 %v1350
        %v1454 = vunpack.c.l.b16 %v1351
        %v1455 = vunpack.c.l.b16 %v1352
        %v1456 = vunpack.c.l.b16 %v1353
        %v1457 = vunpack.c.l.b16 %v1354
        %v1458 = vunpack.c.l.b16 %v1355
        %v1459 = vunpack.c.l.b16 %v1356
        %v1460 = vunpack.c.l.b16 %v1357
        %v1461 = vunpack.c.l.b16 %v1358
        %v1462 = vunpack.c.l.b16 %v1359
        %v1463 = vunpack.c.l.b16 %v1360
        %v1464 = vunpack.c.l.b16 %v1361
        %v1465 = vunpack.c.l.b16 %v1362
        %v1466 = vunpack.c.l.b16 %v1363
        %v1467 = vunpack.c.l.b16 %v1364
        %v1468 = vunpack.c.l.b16 %v1365
        %v1469 = vunpack.c.l.b16 %v1366
        %v1470 = vunpack.c.l.b16 %v1367
        %v1471 = vunpack.c.l.b16 %v1368
        %v1472 = vunpack.c.l.b16 %v1369
        %v1473 = vunpack.c.l.b16 %v1370
        %v1474 = vpack.c.b16 %v1427, %v1426
        %v1475 = vpack.c.b16 %v1429, %v1428
        %v1476 = vpack.c.b16 %v1431, %v1430
        %v1477 = vpack.c.b16 %v1433, %v1432
        %v1478 = vpack.c.b16 %v1435, %v1434
        %v1479 = vpack.c.b16 %v1437, %v1436
        %v1480 = vpack.c.b16 %v1439, %v1438
        %v1481 = vpack.c.b16 %v1441, %v1440
        %v1482 = vpack.c.b16 %v1443, %v1442
        %v1483 = vpack.c.b16 %v1445, %v1444
        %v1484 = vpack.c.b16 %v1447, %v1446
        %v1485 = vpack.c.b16 %v1449, %v1448
        %v1486 = vpack.c.b16 %v1451, %v1450
        %v1487 = vpack.c.b16 %v1453, %v1452
        %v1488 = vpack.c.b16 %v1455, %v1454
        %v1489 = vpack.c.b16 %v1457, %v1456
        %v1490 = vpack.c.b16 %v1459, %v1458
        %v1491 = vpack.c.b16 %v1461, %v1460
        %v1492 = vpack.c.b16 %v1463, %v1462
        %v1493 = vpack.c.b16 %v1465, %v1464
        %v1494 = vpack.c.b16 %v1467, %v1466
        %v1495 = vpack.c.b16 %v1469, %v1468
        %v1496 = vpack.c.b16 %v1471, %v1470
        %v1497 = vpack.c.b16 %v1473, %v1472
        %1522 = vmatprep.subr.bf16.mxu0 0
        %1523 = vmatpush1.bf16.msra.mxu0 %v1481
        %1524 = vmatprep.subr.bf16.mxu0 0
        %1525 = vmatpush1.bf16.msra.mxu0 %v1480
        %1526 = vmatprep.subr.bf16.mxu0 0
        %1527 = vmatpush1.bf16.msra.mxu0 %v1479
        %1528 = vmatprep.subr.bf16.mxu0 0
        %1529 = vmatpush1.bf16.msra.mxu0 %v1478
        %1530 = vmatprep.subr.bf16.mxu0 0
        %1531 = vmatpush1.bf16.msra.mxu0 %v1477
        %1532 = vmatprep.subr.bf16.mxu0 0
        %1533 = vmatpush1.bf16.msra.mxu0 %v1476
        %1534 = vmatprep.subr.bf16.mxu0 0
        %1535 = vmatpush1.bf16.msra.mxu0 %v1475
        %1536 = vmatprep.subr.bf16.mxu0 0
        %1537 = vmatpush1.bf16.msra.mxu0 %v1474
        %1538 = vmatprep.subr.bf16.mxu0 0
        %1539 = vmatpush2.bf16.msra.mxu0 %v1489
        %1540 = vmatprep.subr.bf16.mxu0 0
        %1541 = vmatpush2.bf16.msra.mxu0 %v1488
        %1542 = vmatprep.subr.bf16.mxu0 0
        %1543 = vmatpush2.bf16.msra.mxu0 %v1487
        %1544 = vmatprep.subr.bf16.mxu0 0
        %1545 = vmatpush2.bf16.msra.mxu0 %v1486
        %1546 = vmatprep.subr.bf16.mxu0 0
        %1547 = vmatpush2.bf16.msra.mxu0 %v1485
        %1548 = vmatprep.subr.bf16.mxu0 0
        %1549 = vmatpush2.bf16.msra.mxu0 %v1484
        %1550 = vmatprep.subr.bf16.mxu0 0
        %1551 = vmatpush2.bf16.msra.mxu0 %v1483
        %1552 = vmatprep.subr.bf16.mxu0 0
        %1553 = vmatpush2.bf16.msra.mxu0 %v1482
        %1554 = vmatprep.mubr.bf16.mxu0 %v1291
        %1555 = vmatmul.mubr.bf16.gmra.mxu0 %v1267
        %v1556 = vpop.f32.mrf.mxu0
        %v1557 = vadd.f32 %v1376, %v1556
        %v1558 = vpop.f32.mrf.mxu0
        %v1559 = vpop.f32.mrf.mxu0
        %v1560 = vadd.f32 %v1376, %v1559
        %v1561 = vpop.f32.mrf.mxu0
        %1562 = vmatprep.mubr.bf16.mxu0 %v1292
        %1563 = vmatmul.mubr.bf16.gmra.mxu0 %v1268
        %v1564 = vpop.f32.mrf.mxu0
        %v1565 = vadd.f32 %v1376, %v1564
        %v1566 = vpop.f32.mrf.mxu0
        %v1567 = vpop.f32.mrf.mxu0
        %v1568 = vadd.f32 %v1376, %v1567
        %v1569 = vpop.f32.mrf.mxu0
        %1570 = vmatprep.mubr.bf16.mxu0 %v1293
        %1571 = vmatmul.mubr.bf16.gmra.mxu0 %v1269
        %v1572 = vpop.f32.mrf.mxu0
        %v1573 = vadd.f32 %v1376, %v1572
        %v1574 = vpop.f32.mrf.mxu0
        %v1575 = vpop.f32.mrf.mxu0
        %v1576 = vadd.f32 %v1376, %v1575
        %v1577 = vpop.f32.mrf.mxu0
        %1578 = vmatprep.mubr.bf16.mxu0 %v1294
        %1579 = vmatmul.mubr.bf16.gmra.mxu0 %v1270
        %v1580 = vpop.f32.mrf.mxu0
        %v1581 = vadd.f32 %v1376, %v1580
        %v1582 = vpop.f32.mrf.mxu0
        %v1583 = vpop.f32.mrf.mxu0
        %v1584 = vadd.f32 %v1376, %v1583
        %v1585 = vpop.f32.mrf.mxu0
        %1586 = vmatprep.mubr.bf16.mxu0 %v1295
        %1587 = vmatmul.mubr.bf16.gmra.mxu0 %v1271
        %v1588 = vpop.f32.mrf.mxu0
        %v1589 = vadd.f32 %v1376, %v1588
        %v1590 = vpop.f32.mrf.mxu0
        %v1591 = vpop.f32.mrf.mxu0
        %v1592 = vadd.f32 %v1376, %v1591
        %v1593 = vpop.f32.mrf.mxu0
        %1594 = vmatprep.mubr.bf16.mxu0 %v1296
        %1595 = vmatmul.mubr.bf16.gmra.mxu0 %v1272
        %v1596 = vpop.f32.mrf.mxu0
        %v1597 = vadd.f32 %v1376, %v1596
        %v1598 = vpop.f32.mrf.mxu0
        %v1599 = vpop.f32.mrf.mxu0
        %v1600 = vadd.f32 %v1376, %v1599
        %v1601 = vpop.f32.mrf.mxu0
        %1602 = vmatprep.mubr.bf16.mxu0 %v1297
        %1603 = vmatmul.mubr.bf16.gmra.mxu0 %v1273
        %v1604 = vpop.f32.mrf.mxu0
        %v1605 = vadd.f32 %v1376, %v1604
        %v1606 = vpop.f32.mrf.mxu0
        %v1607 = vpop.f32.mrf.mxu0
        %v1608 = vadd.f32 %v1376, %v1607
        %v1609 = vpop.f32.mrf.mxu0
        %1610 = vmatprep.mubr.bf16.mxu0 %v1298
        %1611 = vmatmul.mubr.bf16.gmra.mxu0 %v1274
        %v1612 = vpop.f32.mrf.mxu0
        %v1613 = vadd.f32 %v1376, %v1612
        %v1614 = vpop.f32.mrf.mxu0
        %v1615 = vpop.f32.mrf.mxu0
        %v1616 = vadd.f32 %v1376, %v1615
        %v1617 = vpop.f32.mrf.mxu0
        %1618 = vdwg.mxu0
        %1619 = vmatprep.subr.bf16.mxu0 0
        %1620 = vmatpush1.bf16.msra.mxu0 %v1497
        %1621 = vmatprep.subr.bf16.mxu0 0
        %1622 = vmatpush1.bf16.msra.mxu0 %v1496
        %1623 = vmatprep.subr.bf16.mxu0 0
        %1624 = vmatpush1.bf16.msra.mxu0 %v1495
        %1625 = vmatprep.subr.bf16.mxu0 0
        %1626 = vmatpush1.bf16.msra.mxu0 %v1494
        %1627 = vmatprep.subr.bf16.mxu0 0
        %1628 = vmatpush1.bf16.msra.mxu0 %v1493
        %1629 = vmatprep.subr.bf16.mxu0 0
        %1630 = vmatpush1.bf16.msra.mxu0 %v1492
        %1631 = vmatprep.subr.bf16.mxu0 0
        %1632 = vmatpush1.bf16.msra.mxu0 %v1491
        %1633 = vmatprep.subr.bf16.mxu0 0
        %1634 = vmatpush1.bf16.msra.mxu0 %v1490
        %1635 = vmatprep.subr.bf16.mxu0 0
        %1636 = vmatpush2.bf16.msra.mxu0 0
        %1637 = vmatprep.subr.bf16.mxu0 0
        %1638 = vmatpush2.bf16.msra.mxu0 0
        %1639 = vmatprep.subr.bf16.mxu0 0
        %1640 = vmatpush2.bf16.msra.mxu0 0
        %1641 = vmatprep.subr.bf16.mxu0 0
        %1642 = vmatpush2.bf16.msra.mxu0 0
        %1643 = vmatprep.subr.bf16.mxu0 0
        %1644 = vmatpush2.bf16.msra.mxu0 0
        %1645 = vmatprep.subr.bf16.mxu0 0
        %1646 = vmatpush2.bf16.msra.mxu0 0
        %1647 = vmatprep.subr.bf16.mxu0 0
        %1648 = vmatpush2.bf16.msra.mxu0 0
        %1649 = vmatprep.subr.bf16.mxu0 0
        %1650 = vmatpush2.bf16.msra.mxu0 0
        %1651 = vmatprep.mubr.bf16.mxu0 0
        %1652 = vmatmul.mubr.bf16.gmra.mxu0 %v1315
        %v1653 = vpop.f32.mrf.mxu0
        %v1654 = vadd.f32 %v1557, %v1653
        %v1655 = vpop.f32.mrf.mxu0
        %v1656 = vpop.f32.mrf.mxu0
        %v1657 = vadd.f32 %v1560, %v1656
        %v1658 = vpop.f32.mrf.mxu0
        %1659 = vmatprep.mubr.bf16.mxu0 0
        %1660 = vmatmul.mubr.bf16.gmra.mxu0 %v1316
        %v1661 = vpop.f32.mrf.mxu0
        %v1662 = vadd.f32 %v1565, %v1661
        %v1663 = vpop.f32.mrf.mxu0
        %v1664 = vpop.f32.mrf.mxu0
        %v1665 = vadd.f32 %v1568, %v1664
        %v1666 = vpop.f32.mrf.mxu0
        %1667 = vmatprep.mubr.bf16.mxu0 0
        %1668 = vmatmul.mubr.bf16.gmra.mxu0 %v1317
        %v1669 = vpop.f32.mrf.mxu0
        %v1670 = vadd.f32 %v1573, %v1669
        %v1671 = vpop.f32.mrf.mxu0
        %v1672 = vpop.f32.mrf.mxu0
        %v1673 = vadd.f32 %v1576, %v1672
        %v1674 = vpop.f32.mrf.mxu0
        %1675 = vmatprep.mubr.bf16.mxu0 0
        %1676 = vmatmul.mubr.bf16.gmra.mxu0 %v1318
        %v1677 = vpop.f32.mrf.mxu0
        %v1678 = vadd.f32 %v1581, %v1677
        %v1679 = vpop.f32.mrf.mxu0
        %v1680 = vpop.f32.mrf.mxu0
        %v1681 = vadd.f32 %v1584, %v1680
        %v1682 = vpop.f32.mrf.mxu0
        %1683 = vmatprep.mubr.bf16.mxu0 0
        %1684 = vmatmul.mubr.bf16.gmra.mxu0 %v1319
        %v1685 = vpop.f32.mrf.mxu0
        %v1686 = vadd.f32 %v1589, %v1685
        %v1687 = vpop.f32.mrf.mxu0
        %v1688 = vpop.f32.mrf.mxu0
        %v1689 = vadd.f32 %v1592, %v1688
        %v1690 = vpop.f32.mrf.mxu0
        %1691 = vmatprep.mubr.bf16.mxu0 0
        %1692 = vmatmul.mubr.bf16.gmra.mxu0 %v1320
        %v1693 = vpop.f32.mrf.mxu0
        %v1694 = vadd.f32 %v1597, %v1693
        %v1695 = vpop.f32.mrf.mxu0
        %v1696 = vpop.f32.mrf.mxu0
        %v1697 = vadd.f32 %v1600, %v1696
        %v1698 = vpop.f32.mrf.mxu0
        %1699 = vmatprep.mubr.bf16.mxu0 0
        %1700 = vmatmul.mubr.bf16.gmra.mxu0 %v1321
        %v1701 = vpop.f32.mrf.mxu0
        %v1702 = vadd.f32 %v1605, %v1701
        %v1703 = vpop.f32.mrf.mxu0
        %v1704 = vpop.f32.mrf.mxu0
        %v1705 = vadd.f32 %v1608, %v1704
        %v1706 = vpop.f32.mrf.mxu0
        %1707 = vmatprep.mubr.bf16.mxu0 0
        %1708 = vmatmul.mubr.bf16.gmra.mxu0 %v1322
        %v1709 = vpop.f32.mrf.mxu0
        %v1710 = vadd.f32 %v1613, %v1709
        %v1711 = vpop.f32.mrf.mxu0
        %v1712 = vpop.f32.mrf.mxu0
        %v1713 = vadd.f32 %v1616, %v1712
        %v1714 = vpop.f32.mrf.mxu0
        %1715 = vdwg.mxu0
        %v1716 = vadd.f32 %v1654, %v458
        %v1717 = vadd.f32 %v1657, %v459
        %v1718 = vadd.f32 %v1662, %v460
        %v1719 = vadd.f32 %v1665, %v461
        %v1720 = vadd.f32 %v1670, %v462
        %v1721 = vadd.f32 %v1673, %v463
        %v1722 = vadd.f32 %v1678, %v464
        %v1723 = vadd.f32 %v1681, %v465
        %v1724 = vadd.f32 %v1686, %v466
        %v1725 = vadd.f32 %v1689, %v467
        %v1726 = vadd.f32 %v1694, %v468
        %v1727 = vadd.f32 %v1697, %v469
        %v1728 = vadd.f32 %v1702, %v470
        %v1729 = vadd.f32 %v1705, %v471
        %v1730 = vadd.f32 %v1710, %v472
        %v1731 = vadd.f32 %v1713, %v473
        %1732 = vst [vmem:[%s446] sm:$0xff] %v1716
        %1733 = vst [vmem:[%s446 + $0x8] sm:$0xff] %v1717
        %1734 = vst [vmem:[%s446 + $0x10] sm:$0xff] %v1718
        %1735 = vst [vmem:[%s446 + $0x18] sm:$0xff] %v1719
        %1736 = vst [vmem:[%s446 + $0x20] sm:$0xff] %v1720
        %1737 = vst [vmem:[%s446 + $0x28] sm:$0xff] %v1721
        %1738 = vst [vmem:[%s446 + $0x30] sm:$0xff] %v1722
        %1739 = vst [vmem:[%s446 + $0x38] sm:$0xff] %v1723
        %1740 = vst [vmem:[%s446 + $0x40] sm:$0xff] %v1724
        %1741 = vst [vmem:[%s446 + $0x48] sm:$0xff] %v1725
        %1742 = vst [vmem:[%s446 + $0x50] sm:$0xff] %v1726
        %1743 = vst [vmem:[%s446 + $0x58] sm:$0xff] %v1727
        %1744 = vst [vmem:[%s446 + $0x60] sm:$0xff] %v1728
        %1745 = vst [vmem:[%s446 + $0x68] sm:$0xff] %v1729
        %1746 = vst [vmem:[%s446 + $0x70] sm:$0xff] %v1730
        %1747 = vst [vmem:[%s446 + $0x78] sm:$0xff] %v1731
        %s1748 = sand.u32 %s234, 1
        %s1749 = scalar_lea.sflag [#allocation6], %s1748
        %s1750 = sand.u32 %s234, 1
        %s1751 = smul.addr %s1750, 128
        %s1752 = scalar_lea.vmem [#allocation13], %s1751
        // Predicated region
        $region69: #{tpu_custom_call.1} parent=47 // pred_check
          %p1753 = pneg %p244
        $region70: #{tpu_custom_call.1} parent=47 // pred_check_branch
          %1755 = sbr.rel (%p1753) target = $region72
        $region71: #{tpu_custom_call.1} parent=47 // pred_region
          %s1756 = smul.u32 16, %s33
          %s1758 = ssub.s32 2048, 2048
          %1759 = vsyncadd %s1749, %s1758
          %s1760 = smul.addr %s32, 64
          %s1761 = sadd.s32 %s1756, %s1760
          %s1762 = smul.addr %s1761, 128
          %s1763 = scalar_lea.hbm %s7, %s1762
          %s1764 = sshll.u32 %s1752, 4
          %s1765 = int_to_ptr.vmem [resolvable:$true] %s1764
          %1770 = dma.vmem_to_hbm [thread:$0]  %s1765, 2048, %s1763, %s1749, 128, 128, 8
        $region72: #{tpu_custom_call.1} parent=47 // pred_fallthru
          _
      $region48: #{tpu_custom_call.1} parent=5 // pred_fallthru
        _
      %p1771 = scmp.le.s32.totalorder 2, %s23
      // Predicated region
      $region73: #{tpu_custom_call.1} parent=5 // pred_check
        %p1772 = pneg %p1771
      $region74: #{tpu_custom_call.1} parent=5 // pred_check_branch
        %1774 = sbr.rel (%p1772) target = $region76
      $region75: #{tpu_custom_call.1} parent=5 // pred_region
        %s1775 = ssub.s32 %s23, 2
        // Predicated region
        $region77: #{tpu_custom_call.1} parent=75 // pred_check
          %p1776 = pneg %p250
        $region78: #{tpu_custom_call.1} parent=75 // pred_check_branch
          %1778 = sbr.rel (%p1776) target = $region80
        $region79: #{tpu_custom_call.1} parent=75 // pred_region
          %s1779 = sand.u32 %s235, 1
          %s1780 = scalar_lea.sflag [#allocation6], %s1779
          %s1781 = sand.u32 %s235, 1
          %s1782 = smul.addr %s1781, 128
          %s1783 = scalar_lea.vmem [#allocation13], %s1782
          %1784 = dma.done %s1780, 2048
        $region80: #{tpu_custom_call.1} parent=75 // pred_fallthru
          _
      $region76: #{tpu_custom_call.1} parent=5 // pred_fallthru
        _
    $region6: #{tpu_custom_call.1} parent=1 // loop_footer
      %s27 = sadd.s32 1, %s23
    $region7: #{tpu_custom_call.1} parent=1 // loop_footer_branch
      %22 = sbr.rel target = $region3
    $region8: #{tpu_custom_call.1} parent=1 // loop_exit
      _
    %1785 = vsyncpa [#allocation5], 1
    %s1786 = scalar_lea.sflag [#allocation5], 1
    %1787 = vsyncpa %s1786, 1
    %1788 = vsyncpa [#allocation8], 1
    %s1789 = scalar_lea.sflag [#allocation8], 1
    %1790 = vsyncpa %s1789, 1
    %1791 = vsyncpa [#allocation11], 1
    %1792 = vsyncpa [#allocation6], 1
    %s1793 = scalar_lea.sflag [#allocation6], 1
    %1794 = vsyncpa %s1793, 1

</llo_original>
